<compile_context>
chip_gen: v5e
topology: v5e:2x2
jax: 0.10.0
libtpu: 0.0.40
codegen_flags: <defaults>
</compile_context>

<pallas_src>
import functools
from math import sqrt

import jax
import jax.numpy as jnp
from jax import lax
from jax.experimental import pallas as pl
from jax.experimental.pallas import tpu as pltpu


def _rup(x, m):
    return ((x + m - 1) // m) * m


def _pad2(x, rows, cols):
    return jnp.pad(x, ((0, rows - x.shape[0]), (0, cols - x.shape[1])))


def _vmem_cap_bytes():
    try:
        return int(pltpu.get_tpu_info().vmem_capacity_bytes)
    except Exception:
        return 64 * 1024 * 1024           # conservative (v7x-sized) fallback


def _vmem_limit(est_bytes, cap):
    hi = int(cap * 4 // 5)                # headroom under physical VMEM
    lo = min(32 * 1024 * 1024, hi)
    return int(max(lo, min(hi, est_bytes * 2 + (4 << 20))))


# ---------------------------------------------------------------------------
# Kernel A: tok2ent pooling (Document -> Graph flow)
# ---------------------------------------------------------------------------
def _pool_kernel(binm_ref, ctx_ref, pooled_ref, sum_acc, max_acc,
                 *, m_real, inv_m, d2p):
    t = pl.program_id(1)
    f32 = jnp.float32
    tm = ctx_ref.shape[0]

    @pl.when(t == 0)
    def _():
        sum_acc[...] = jnp.zeros_like(sum_acc)
        max_acc[...] = jnp.full_like(max_acc, -jnp.inf)

    binm = binm_ref[...]                                  # (tm, nb)  bf16 {0,1}
    ctx = ctx_ref[...]                                    # (tm, d2p) bf16

    # mean pooling: bin_M^T @ ctx as a transposed-LHS matmul (MXU, f32 acc)
    sum_acc[...] += lax.dot_general(
        binm, ctx, (((0,), (0,)), ((), ())), preferred_element_type=f32)

    # max pooling over bin_M[m, n] * ctx[m, d] in 8-token chunks.
    # Working set per step is one (nb, d2p) tile (no (Np, tm, d2p) temporary).
    # Non-member real tokens contribute 0 (reference semantics); padded tokens
    # are excluded with a per-token scalar -inf fill (only the last tile has any).
    eye8 = (lax.broadcasted_iota(jnp.int32, (8, 8), 0) ==
            lax.broadcasted_iota(jnp.int32, (8, 8), 1)).astype(binm.dtype)
    tok_base = t * tm

    def chunk(c, acc):
        off = pl.multiple_of(c * 8, 8)
        bm_c = binm_ref[pl.ds(off, 8), :]                 # (8, nb)
        cx_c = ctx_ref[pl.ds(off, 8), :].astype(f32)      # (8, d2p)
        # columns of bin_M for these 8 tokens via a tiny transposing matmul
        # (exact for 0/1 values; avoids a big relayout / 3-D broadcast)
        bm_t = lax.dot_general(bm_c, eye8, (((0,), (0,)), ((), ())),
                               preferred_element_type=f32)  # (nb, 8)
        for u in range(8):
            fill = jnp.where(tok_base + off + u < m_real,
                             0.0, -jnp.inf).astype(f32)
            contrib = jnp.where(bm_t[:, u:u + 1] != 0.0, cx_c[u:u + 1, :], fill)
            acc = jnp.maximum(acc, contrib)
        return acc

    max_acc[...] = lax.fori_loop(0, tm // 8, chunk, max_acc[...], unroll=2)

    @pl.when(t == pl.num_programs(1) - 1)
    def _():
        pooled_ref[:, 0:d2p] = sum_acc[...] * inv_m
        pooled_ref[:, d2p:2 * d2p] = max_acc[...]


# ---------------------------------------------------------------------------
# Kernel B: Dynamic Graph Attention -> E_t (N, d2)
# ---------------------------------------------------------------------------
def _attention_kernel(pooled_ref, qry_ref, adjt_ref, Vs_ref, UTs_ref,
                      b_ref, W1_ref, W2_ref, et_ref,
                      *, n_real, inv_l, inv_droot):
    f32 = jnp.float32
    bf = Vs_ref.dtype

    pooled = pooled_ref[...]                              # (Np, 2*d2p) f32

    # query mean (padded rows are zero; divide by the real L)
    q_mean = jnp.sum(qry_ref[...].astype(f32), axis=0, keepdims=True) * inv_l

    # Reference bug reproduced: only sigmoid(gamma_0) gates ALL entities.
    qV = jnp.dot(q_mean.astype(bf), Vs_ref[...], preferred_element_type=f32)
    gamma0 = jnp.sum(qV * pooled[0:1, :]) * inv_droot
    mask0 = jax.nn.sigmoid(gamma0)

    # hidden[i] = U @ E[i] + b  ==  mask0 * ([mean|max] @ [U1|U2]^T) + b
    hidden = mask0 * jnp.dot(pooled.astype(bf), UTs_ref[...],
                             preferred_element_type=f32) + b_ref[...]

    # betas^T[i, j] = betas[j, i] = adj[j, i] * leaky_relu(W1.h_j + W2.h_i)
    s = jnp.sum(hidden * W1_ref[...], axis=1, keepdims=True)   # (Np, 1)
    t = jnp.sum(hidden * W2_ref[...], axis=1, keepdims=True)   # (Np, 1)
    scores_t = t + s.T                                         # (Np, Np)
    adjt = adjt_ref[...].astype(f32)                           # adjt[i,j]=adj[j,i]
    betas_t = adjt * jax.nn.leaky_relu(scores_t, negative_slope=0.01)

    # Reference row-softmax == column-softmax here; shifted by the column max
    # (overflow-safe, shift-invariant, exp(0)=1 non-edge contributions kept).
    # Padded entity rows excluded from the denominator.
    m_col = jnp.max(betas_t, axis=0, keepdims=True)            # (1, Np)
    ex_t = jnp.exp(betas_t - m_col)
    rows = lax.broadcasted_iota(jnp.int32, ex_t.shape, 0)
    colsum = jnp.sum(jnp.where(rows < n_real, ex_t, 0.0), axis=0, keepdims=True)
    alphas_t = ex_t * pl.reciprocal(colsum, approx=True)       # = alphas[j, i]

    # new_info[i] = sum_j adj[i, j] * alphas[j, i] * hidden[j]
    adj = jnp.transpose(adjt)                                  # adj[i, j]
    coef = adj * alphas_t
    new_info = jnp.dot(coef.astype(bf), hidden.astype(bf),
                       preferred_element_type=f32)
    et_ref[...] = jnp.maximum(new_info, 0.0).astype(et_ref.dtype)


# ---------------------------------------------------------------------------
# Kernel C: graph2doc (Graph -> Document flow), one LSTM step from zero state
# ---------------------------------------------------------------------------
def _g2d_kernel(ctx_ref, binm_ref, et_ref, waT_ref, wbT_ref, bias_ref, out_ref,
                *, d2p):
    f32 = jnp.float32
    # emb_info = bin_M @ E_t
    emb_info = jnp.dot(binm_ref[...], et_ref[...], preferred_element_type=f32)

    # concat([ctx, emb_info]) @ W_ih^T expressed as two lane-aligned matmuls;
    # forget gate dropped (c0 == 0 makes it dead code).
    gates = (jnp.dot(ctx_ref[...], waT_ref[...], preferred_element_type=f32) +
             jnp.dot(emb_info.astype(wbT_ref.dtype), wbT_ref[...],
                     preferred_element_type=f32) +
             bias_ref[...])                                    # (tm, 3*d2p)
    i_g = jax.nn.sigmoid(gates[:, 0:d2p])
    g_g = jnp.tanh(gates[:, d2p:2 * d2p])
    o_g = jax.nn.sigmoid(gates[:, 2 * d2p:3 * d2p])
    out_ref[...] = (o_g * jnp.tanh(i_g * g_g)).astype(out_ref.dtype)


# ---------------------------------------------------------------------------
# Wrapper
# ---------------------------------------------------------------------------
def fusion_block_forward(context_emb, query_emb, bin_M, adj, params, passes=1,
                         *, mxu_dtype=jnp.bfloat16):
    """Pallas FusionBlock forward (passes=1)."""
    # TODO(synk): BiDAFNet (self.bidaf) is an undefined external class; it only
    # affects results for passes > 1, so only passes == 1 is supported here.
    assert passes == 1
    M, d2 = context_emb.shape
    L = query_emb.shape[0]
    N = bin_M.shape[1]
    assert M >= 1 and L >= 1 and N >= 1

    f32 = jnp.float32
    bf = mxu_dtype
    cap = _vmem_cap_bytes()

    # lane/sublane-friendly padded sizes
    d2p = _rup(d2, 128)
    Np = _rup(N, 128)
    Lp = _rup(L, 8)
    nb = 128                              # entity block (Np is a multiple of 128)
    ne = Np // nb

    # kernel A token tile: modest (per-step work is independent of tile size)
    m8 = _rup(M, 8)
    if m8 <= 128:
        tm1, Mp1 = m8, m8
    else:
        tm1 = 128
        Mp1 = _rup(M, tm1)
    nt1 = Mp1 // tm1

    # kernel C token tile: large (streaming, mem-bound); bigger on 128-MiB parts
    tile_c = 1024 if cap >= (100 << 20) else 512
    if m8 <= tile_c:
        tm2, Mp2 = m8, m8
    else:
        tm2 = tile_c
        Mp2 = _rup(M, tm2)
    nt2 = Mp2 // tm2

    # ---- pad / split / pre-transpose operands once, in XLA ----
    ctx1 = _pad2(context_emb.astype(bf), Mp1, d2p)            # (Mp1, d2p)
    binm1 = _pad2(bin_M.astype(bf), Mp1, Np)                  # (Mp1, Np)
    if Mp2 == Mp1:
        ctx2, binm2 = ctx1, binm1
    else:
        ctx2 = _pad2(context_emb.astype(bf), Mp2, d2p)
        binm2 = _pad2(bin_M.astype(bf), Mp2, Np)
    qry_p = _pad2(query_emb.astype(bf), Lp, d2p)
    # adjacency streamed once (transposed, bf16 -- exact for 0/1); the other
    # orientation is recovered with a single in-kernel transpose.
    adjt_p = jnp.transpose(_pad2(adj.astype(f32), Np, Np)).astype(bf)

    V = params["V"].astype(f32)                               # (d2, 2*d2)
    U = params["U"].astype(f32)                               # (d2, 2*d2)
    b_row = jnp.reshape(params["b"], (1, d2)).astype(f32)
    W_row = jnp.reshape(params["W"], (1, 2 * d2)).astype(f32)

    # fused / stacked weights: lanes [0:d2p] pair with the mean half of the
    # pooled slab, lanes [d2p:2*d2p] with the max half.
    Vs = jnp.zeros((d2p, 2 * d2p), f32)
    Vs = Vs.at[:d2, :d2].set(V[:, :d2])
    Vs = Vs.at[:d2, d2p:d2p + d2].set(V[:, d2:])
    UTs = jnp.zeros((2 * d2p, d2p), f32)
    UTs = UTs.at[:d2, :d2].set(jnp.transpose(U[:, :d2]))
    UTs = UTs.at[d2p:d2p + d2, :d2].set(jnp.transpose(U[:, d2:]))
    Vs = Vs.astype(bf)
    UTs = UTs.astype(bf)
    b_p = _pad2(b_row, 1, d2p)
    W1_p = _pad2(W_row[:, :d2], 1, d2p)
    W2_p = _pad2(W_row[:, d2:], 1, d2p)

    # LSTM(2*d2 -> d2), one step from zero state: only weight_ih and the biases
    # matter; the forget-gate rows are dropped. Gates packed per d2p block.
    w_ih = params["w_ih"].astype(f32)                         # (4*d2, 2*d2) [i,f,g,o]
    b_gate = jnp.reshape(params["b_ih"] + params["b_hh"], (4 * d2,)).astype(f32)
    keep = (slice(0, d2), slice(2 * d2, 3 * d2), slice(3 * d2, 4 * d2))   # i, g, o
    waT = jnp.zeros((d2p, 3 * d2p), f32)
    wbT = jnp.zeros((d2p, 3 * d2p), f32)
    bias = jnp.zeros((1, 3 * d2p), f32)
    for g, sl in enumerate(keep):
        waT = waT.at[:d2, g * d2p:g * d2p + d2].set(jnp.transpose(w_ih[sl, :d2]))
        wbT = wbT.at[:d2, g * d2p:g * d2p + d2].set(jnp.transpose(w_ih[sl, d2:]))
        bias = bias.at[0, g * d2p:g * d2p + d2].set(b_gate[sl])
    waT = waT.astype(bf)
    wbT = wbT.astype(bf)

    # ---- kernel A: tok2ent pooling -> fused [mean | max] slab (Np, 2*d2p) ----
    pool_kernel = functools.partial(_pool_kernel, m_real=M,
                                    inv_m=float(1.0 / M), d2p=d2p)
    est_a = (2 * (tm1 * nb + tm1 * d2p) * 2 + 2 * nb * 2 * d2p * 4
             + 2 * nb * d2p * 4)
    pooled = pl.pallas_call(
        pool_kernel,
        out_shape=jax.ShapeDtypeStruct((Np, 2 * d2p), f32),
        grid_spec=pltpu.PrefetchScalarGridSpec(
            num_scalar_prefetch=0,
            grid=(ne, nt1),
            in_specs=[
                pl.BlockSpec((tm1, nb), lambda e, t: (t, e)),    # bin_M tile
                pl.BlockSpec((tm1, d2p), lambda e, t: (t, 0)),   # ctx tile
            ],
            out_specs=pl.BlockSpec((nb, 2 * d2p), lambda e, t: (e, 0)),
            scratch_shapes=[pltpu.VMEM((nb, d2p), f32),          # mean (sum) acc
                            pltpu.VMEM((nb, d2p), f32)]),        # max acc
        compiler_params=pltpu.CompilerParams(
            dimension_semantics=("parallel", "arbitrary"),
            vmem_limit_bytes=_vmem_limit(est_a, cap)),
        cost_estimate=pl.CostEstimate(
            flops=int(4 * Np * Mp1 * d2p),
            transcendentals=0,
            bytes_accessed=int(ne * Mp1 * d2p * 2 + Mp1 * Np * 2
                               + Np * 2 * d2p * 4)),
    )(binm1, ctx1)

    # ---- kernel B: Dynamic Graph Attention -> E_t (Np, d2p) ----
    att_kernel = functools.partial(_attention_kernel, n_real=N,
                                   inv_l=float(1.0 / L),
                                   inv_droot=float(1.0 / sqrt(d2)))
    est_b = (Np * 2 * d2p * 4 + Np * Np * 2 + Lp * d2p * 2
             + 3 * d2p * 2 * d2p * 2 + 6 * Np * Np * 4 + Np * d2p * 4)
    e_t = pl.pallas_call(
        att_kernel,
        out_shape=jax.ShapeDtypeStruct((Np, d2p), bf),
        compiler_params=pltpu.CompilerParams(
            vmem_limit_bytes=_vmem_limit(est_b, cap)),
        cost_estimate=pl.CostEstimate(
            flops=int(4 * Np * d2p * d2p + 2 * Np * Np * d2p + 8 * Np * Np),
            transcendentals=int(Np * Np + 4),
            bytes_accessed=int(est_b)),
    )(pooled, qry_p, adjt_p, Vs, UTs, b_p, W1_p, W2_p)

    # ---- kernel C: graph2doc (per-token tiles, parallel / megacore) -> Ct ----
    g2d_kernel = functools.partial(_g2d_kernel, d2p=d2p)
    const = lambda i: (0, 0)
    est_c = (2 * (tm2 * d2p * 2 + tm2 * Np * 2 + tm2 * d2p * 2)
             + 2 * (Np * d2p * 2 + 2 * d2p * 3 * d2p * 2 + 3 * d2p * 4))
    ct = pl.pallas_call(
        g2d_kernel,
        out_shape=jax.ShapeDtypeStruct((Mp2, d2p), bf),
        grid_spec=pltpu.PrefetchScalarGridSpec(
            num_scalar_prefetch=0,
            grid=(nt2,),
            in_specs=[
                pl.BlockSpec((tm2, d2p), lambda i: (i, 0)),   # ctx token tile
                pl.BlockSpec((tm2, Np), lambda i: (i, 0)),    # bin_M token tile
                pl.BlockSpec((Np, d2p), const),               # E_t (resident)
                pl.BlockSpec((d2p, 3 * d2p), const),          # W_ih^T (ctx half)
                pl.BlockSpec((d2p, 3 * d2p), const),          # W_ih^T (emb half)
                pl.BlockSpec((1, 3 * d2p), const),            # b_ih + b_hh
            ],
            out_specs=pl.BlockSpec((tm2, d2p), lambda i: (i, 0))),
        compiler_params=pltpu.CompilerParams(
            dimension_semantics=("parallel",),
            vmem_limit_bytes=_vmem_limit(est_c, cap)),
        cost_estimate=pl.CostEstimate(
            flops=int(2 * Mp2 * Np * d2p + 4 * Mp2 * d2p * 3 * d2p),
            transcendentals=int(4 * Mp2 * d2p),
            bytes_accessed=int(Mp2 * d2p * 2 + Mp2 * Np * 2 + Np * d2p * 2
                               + 2 * d2p * 3 * d2p * 2 + Mp2 * d2p * 2)),
    )(ctx2, binm2, e_t, waT, wbT, bias)

    return ct[:M, :d2].astype(jnp.float32)


if __name__ == "__main__":
    # Small deterministic example: M tokens, L query tokens, N entities, d2 hidden.
    M, L, N, d2 = 16, 8, 8, 32

    key = jax.random.PRNGKey(0)
    ks = jax.random.split(key, 11)

    context_emb = jax.random.normal(ks[0], (M, d2), jnp.float32)
    query_emb = jax.random.normal(ks[1], (L, d2), jnp.float32)
    bin_M = (jax.random.uniform(ks[2], (M, N)) < 0.3).astype(jnp.float32)
    adj = (jax.random.uniform(ks[3], (N, N)) < 0.4).astype(jnp.float32)
    adj = adj * (1.0 - jnp.eye(N, dtype=jnp.float32))   # no self loops

    # Parameters (deterministic synthetic init; the torch module never inits V/U/b/W).
    params = {
        "V": 0.1 * jax.random.normal(ks[4], (d2, 2 * d2), jnp.float32),
        "U": 0.1 * jax.random.normal(ks[5], (d2, 2 * d2), jnp.float32),
        "b": 0.1 * jax.random.normal(ks[6], (1, d2), jnp.float32),      # row (== b.T)
        "W": 0.1 * jax.random.normal(ks[7], (1, 2 * d2), jnp.float32),  # row (== W.T)
        # nn.LSTM(2*d2, d2): weight_hh is unused for one step from zero state.
        "w_ih": 0.1 * jax.random.normal(ks[8], (4 * d2, 2 * d2), jnp.float32),
        "b_ih": 0.1 * jax.random.normal(ks[9], (1, 4 * d2), jnp.float32),
        "b_hh": 0.1 * jax.random.normal(ks[10], (1, 4 * d2), jnp.float32),
    }

    Ct = fusion_block_forward(context_emb, query_emb, bin_M, adj, params, passes=1)
    Ct = jax.block_until_ready(Ct)

    assert Ct.shape == (M, d2)
    assert bool(jnp.all(jnp.isfinite(Ct)))
    print("KERNEL_OK")
</pallas_src>

<mosaic_0001>
module attributes {stable_mosaic.version = 11 : i64} {
  func.func @_pool_kernel(%arg0: i32, %arg1: i32, %arg2: memref<16x128xbf16, #tpu.memory_space<vmem>>, %arg3: memref<16x128xbf16, #tpu.memory_space<vmem>>, %arg4: memref<128x256xf32, #tpu.memory_space<vmem>>, %arg5: memref<128x128xf32, #tpu.memory_space<vmem>>, %arg6: memref<128x128xf32, #tpu.memory_space<vmem>>) attributes {dimension_semantics = [#tpu.dimension_semantics<parallel>, #tpu.dimension_semantics<arbitrary>], iteration_bounds = array<i64: 1, 1>, scalar_prefetch = 0 : i64, scratch_operands = 2 : i64, tpu.core_type = #tpu.core_type<tc>, window_params = [{transform_indices = @transform_0, window_bounds = array<i64: 16, 128>}, {transform_indices = @transform_1, window_bounds = array<i64: 16, 128>}, {transform_indices = @transform_2, window_bounds = array<i64: 128, 256>}]} {
    %c0_i32 = arith.constant 0 : i32
    %0 = arith.cmpi eq, %arg1, %c0_i32 : i32
    %1 = arith.extui %0 : i1 to i32
    %c0_i32_0 = arith.constant 0 : i32
    %2 = arith.cmpi ne, %1, %c0_i32_0 : i32
    scf.if %2 {
      %cst_97 = arith.constant 0.000000e+00 : f32
      %277 = vector.broadcast %cst_97 : f32 to vector<128x128xf32>
      %c0_98 = arith.constant 0 : index
      %c0_99 = arith.constant 0 : index
      %278 = vector.load %arg5[%c0_98, %c0_99] : memref<128x128xf32, #tpu.memory_space<vmem>>, vector<128x128xf32>
      tpu.vector_store %arg5[%c0_98, %c0_99], %277 {strides = array<i32>} : memref<128x128xf32, #tpu.memory_space<vmem>>, vector<128x128xf32>,
      %cst_100 = arith.constant 0xFF800000 : f32
      %279 = vector.broadcast %cst_100 : f32 to vector<128x128xf32>
      %c0_101 = arith.constant 0 : index
      %c0_102 = arith.constant 0 : index
      %280 = vector.load %arg6[%c0_101, %c0_102] : memref<128x128xf32, #tpu.memory_space<vmem>>, vector<128x128xf32>
      tpu.vector_store %arg6[%c0_101, %c0_102], %279 {strides = array<i32>} : memref<128x128xf32, #tpu.memory_space<vmem>>, vector<128x128xf32>,
    } else {
    }
    %c0 = arith.constant 0 : index
    %c0_1 = arith.constant 0 : index
    %3 = vector.load %arg2[%c0, %c0_1] : memref<16x128xbf16, #tpu.memory_space<vmem>>, vector<16x128xbf16>
    %c0_2 = arith.constant 0 : index
    %c0_3 = arith.constant 0 : index
    %4 = vector.load %arg3[%c0_2, %c0_3] : memref<16x128xbf16, #tpu.memory_space<vmem>>, vector<16x128xbf16>
    %c0_4 = arith.constant 0 : index
    %c0_5 = arith.constant 0 : index
    %5 = vector.load %arg5[%c0_4, %c0_5] : memref<128x128xf32, #tpu.memory_space<vmem>>, vector<128x128xf32>
    %cst = arith.constant dense<0.000000e+00> : vector<128x128xf32>
    %6 = tpu.matmul %3, %4, %cst {dimension_numbers = #tpu.dot_dimension_numbers<[0], [0], [1], [1], [0, 1, 1, 1], [], []>} : vector<16x128xbf16>, vector<16x128xbf16>, vector<128x128xf32> -> vector<128x128xf32>
    %7 = arith.addf %5, %6 : vector<128x128xf32>
    %c0_6 = arith.constant 0 : index
    %c0_7 = arith.constant 0 : index
    %8 = vector.load %arg5[%c0_6, %c0_7] : memref<128x128xf32, #tpu.memory_space<vmem>>, vector<128x128xf32>
    tpu.vector_store %arg5[%c0_6, %c0_7], %7 {strides = array<i32>} : memref<128x128xf32, #tpu.memory_space<vmem>>, vector<128x128xf32>,
    %9 = tpu.iota {dimensions = array<i32: 0>} : vector<8x8xi32>
    %10 = tpu.iota {dimensions = array<i32: 1>} : vector<8x8xi32>
    %11 = arith.cmpi eq, %9, %10 : vector<8x8xi32>
    %12 = arith.extui %11 : vector<8x8xi1> to vector<8x8xi32>
    %13 = arith.sitofp %12 : vector<8x8xi32> to vector<8x8xf32>
    %14 = arith.truncf %13 : vector<8x8xf32> to vector<8x8xbf16>
    %c16_i32 = arith.constant 16 : i32
    %15 = arith.muli %arg1, %c16_i32 : i32
    %c0_8 = arith.constant 0 : index
    %c0_9 = arith.constant 0 : index
    %16 = vector.load %arg6[%c0_8, %c0_9] : memref<128x128xf32, #tpu.memory_space<vmem>>, vector<128x128xf32>
    %c0_i32_10 = arith.constant 0 : i32
    %c8_i32 = arith.constant 8 : i32
    %17 = arith.muli %c0_i32_10, %c8_i32 : i32
    %18 = tpu.assume_multiple %17, 8 : i32
    %19 = arith.index_cast %18 : i32 to index
    %c0_11 = arith.constant 0 : index
    %20 = vector.load %arg2[%19, %c0_11] : memref<16x128xbf16, #tpu.memory_space<vmem>>, vector<8x128xbf16>
    %21 = arith.index_cast %18 : i32 to index
    %c0_12 = arith.constant 0 : index
    %22 = vector.load %arg3[%21, %c0_12] : memref<16x128xbf16, #tpu.memory_space<vmem>>, vector<8x128xbf16>
    %23 = arith.extf %22 : vector<8x128xbf16> to vector<8x128xf32>
    %cst_13 = arith.constant dense<0.000000e+00> : vector<128x8xf32>
    %24 = tpu.matmul %20, %14, %cst_13 {dimension_numbers = #tpu.dot_dimension_numbers<[0], [0], [1], [1], [0, 1, 1, 1], [], []>} : vector<8x128xbf16>, vector<8x8xbf16>, vector<128x8xf32> -> vector<128x8xf32>
    %25 = arith.addi %15, %18 : i32
    %c0_i32_14 = arith.constant 0 : i32
    %26 = arith.addi %25, %c0_i32_14 : i32
    %c16_i32_15 = arith.constant 16 : i32
    %27 = arith.cmpi slt, %26, %c16_i32_15 : i32
    %cst_16 = arith.constant 0.000000e+00 : f32
    %cst_17 = arith.constant 0xFF800000 : f32
    %28 = arith.select %27, %cst_16, %cst_17 : f32
    %29 = vector.extract_strided_slice %24 {offsets = [0, 0], sizes = [128, 1], strides = [1, 1]} : vector<128x8xf32> to vector<128x1xf32>
    %cst_18 = arith.constant 0.000000e+00 : f32
    %30 = vector.broadcast %cst_18 : f32 to vector<128x1xf32>
    %31 = arith.cmpf one, %29, %30 : vector<128x1xf32>
    %32 = vector.extract_strided_slice %23 {offsets = [0, 0], sizes = [1, 128], strides = [1, 1]} : vector<8x128xf32> to vector<1x128xf32>
    %33 = vector.shape_cast %31 : vector<128x1xi1> to vector<128x1xi1>
    %34 = vector.broadcast %33 : vector<128x1xi1> to vector<128x128xi1>
    %35 = vector.shape_cast %32 : vector<1x128xf32> to vector<1x128xf32>
    %36 = vector.broadcast %35 : vector<1x128xf32> to vector<128x128xf32>
    %37 = vector.broadcast %28 : f32 to vector<128x128xf32>
    %38 = arith.select %34, %36, %37 : vector<128x128xi1>, vector<128x128xf32>
    %39 = arith.maximumf %16, %38 : vector<128x128xf32>
    %40 = arith.addi %15, %18 : i32
    %c1_i32 = arith.constant 1 : i32
    %41 = arith.addi %40, %c1_i32 : i32
    %c16_i32_19 = arith.constant 16 : i32
    %42 = arith.cmpi slt, %41, %c16_i32_19 : i32
    %cst_20 = arith.constant 0.000000e+00 : f32
    %cst_21 = arith.constant 0xFF800000 : f32
    %43 = arith.select %42, %cst_20, %cst_21 : f32
    %44 = vector.extract_strided_slice %24 {offsets = [0, 1], sizes = [128, 1], strides = [1, 1]} : vector<128x8xf32> to vector<128x1xf32>
    %cst_22 = arith.constant 0.000000e+00 : f32
    %45 = vector.broadcast %cst_22 : f32 to vector<128x1xf32>
    %46 = arith.cmpf one, %44, %45 : vector<128x1xf32>
    %47 = vector.extract_strided_slice %23 {offsets = [1, 0], sizes = [1, 128], strides = [1, 1]} : vector<8x128xf32> to vector<1x128xf32>
    %48 = vector.shape_cast %46 : vector<128x1xi1> to vector<128x1xi1>
    %49 = vector.broadcast %48 : vector<128x1xi1> to vector<128x128xi1>
    %50 = vector.shape_cast %47 : vector<1x128xf32> to vector<1x128xf32>
    %51 = vector.broadcast %50 : vector<1x128xf32> to vector<128x128xf32>
    %52 = vector.broadcast %43 : f32 to vector<128x128xf32>
    %53 = arith.select %49, %51, %52 : vector<128x128xi1>, vector<128x128xf32>
    %54 = arith.maximumf %39, %53 : vector<128x128xf32>
    %55 = arith.addi %15, %18 : i32
    %c2_i32 = arith.constant 2 : i32
    %56 = arith.addi %55, %c2_i32 : i32
    %c16_i32_23 = arith.constant 16 : i32
    %57 = arith.cmpi slt, %56, %c16_i32_23 : i32
    %cst_24 = arith.constant 0.000000e+00 : f32
    %cst_25 = arith.constant 0xFF800000 : f32
    %58 = arith.select %57, %cst_24, %cst_25 : f32
    %59 = vector.extract_strided_slice %24 {offsets = [0, 2], sizes = [128, 1], strides = [1, 1]} : vector<128x8xf32> to vector<128x1xf32>
    %cst_26 = arith.constant 0.000000e+00 : f32
    %60 = vector.broadcast %cst_26 : f32 to vector<128x1xf32>
    %61 = arith.cmpf one, %59, %60 : vector<128x1xf32>
    %62 = vector.extract_strided_slice %23 {offsets = [2, 0], sizes = [1, 128], strides = [1, 1]} : vector<8x128xf32> to vector<1x128xf32>
    %63 = vector.shape_cast %61 : vector<128x1xi1> to vector<128x1xi1>
    %64 = vector.broadcast %63 : vector<128x1xi1> to vector<128x128xi1>
    %65 = vector.shape_cast %62 : vector<1x128xf32> to vector<1x128xf32>
    %66 = vector.broadcast %65 : vector<1x128xf32> to vector<128x128xf32>
    %67 = vector.broadcast %58 : f32 to vector<128x128xf32>
    %68 = arith.select %64, %66, %67 : vector<128x128xi1>, vector<128x128xf32>
    %69 = arith.maximumf %54, %68 : vector<128x128xf32>
    %70 = arith.addi %15, %18 : i32
    %c3_i32 = arith.constant 3 : i32
    %71 = arith.addi %70, %c3_i32 : i32
    %c16_i32_27 = arith.constant 16 : i32
    %72 = arith.cmpi slt, %71, %c16_i32_27 : i32
    %cst_28 = arith.constant 0.000000e+00 : f32
    %cst_29 = arith.constant 0xFF800000 : f32
    %73 = arith.select %72, %cst_28, %cst_29 : f32
    %74 = vector.extract_strided_slice %24 {offsets = [0, 3], sizes = [128, 1], strides = [1, 1]} : vector<128x8xf32> to vector<128x1xf32>
    %cst_30 = arith.constant 0.000000e+00 : f32
    %75 = vector.broadcast %cst_30 : f32 to vector<128x1xf32>
    %76 = arith.cmpf one, %74, %75 : vector<128x1xf32>
    %77 = vector.extract_strided_slice %23 {offsets = [3, 0], sizes = [1, 128], strides = [1, 1]} : vector<8x128xf32> to vector<1x128xf32>
    %78 = vector.shape_cast %76 : vector<128x1xi1> to vector<128x1xi1>
    %79 = vector.broadcast %78 : vector<128x1xi1> to vector<128x128xi1>
    %80 = vector.shape_cast %77 : vector<1x128xf32> to vector<1x128xf32>
    %81 = vector.broadcast %80 : vector<1x128xf32> to vector<128x128xf32>
    %82 = vector.broadcast %73 : f32 to vector<128x128xf32>
    %83 = arith.select %79, %81, %82 : vector<128x128xi1>, vector<128x128xf32>
    %84 = arith.maximumf %69, %83 : vector<128x128xf32>
    %85 = arith.addi %15, %18 : i32
    %c4_i32 = arith.constant 4 : i32
    %86 = arith.addi %85, %c4_i32 : i32
    %c16_i32_31 = arith.constant 16 : i32
    %87 = arith.cmpi slt, %86, %c16_i32_31 : i32
    %cst_32 = arith.constant 0.000000e+00 : f32
    %cst_33 = arith.constant 0xFF800000 : f32
    %88 = arith.select %87, %cst_32, %cst_33 : f32
    %89 = vector.extract_strided_slice %24 {offsets = [0, 4], sizes = [128, 1], strides = [1, 1]} : vector<128x8xf32> to vector<128x1xf32>
    %cst_34 = arith.constant 0.000000e+00 : f32
    %90 = vector.broadcast %cst_34 : f32 to vector<128x1xf32>
    %91 = arith.cmpf one, %89, %90 : vector<128x1xf32>
    %92 = vector.extract_strided_slice %23 {offsets = [4, 0], sizes = [1, 128], strides = [1, 1]} : vector<8x128xf32> to vector<1x128xf32>
    %93 = vector.shape_cast %91 : vector<128x1xi1> to vector<128x1xi1>
    %94 = vector.broadcast %93 : vector<128x1xi1> to vector<128x128xi1>
    %95 = vector.shape_cast %92 : vector<1x128xf32> to vector<1x128xf32>
    %96 = vector.broadcast %95 : vector<1x128xf32> to vector<128x128xf32>
    %97 = vector.broadcast %88 : f32 to vector<128x128xf32>
    %98 = arith.select %94, %96, %97 : vector<128x128xi1>, vector<128x128xf32>
    %99 = arith.maximumf %84, %98 : vector<128x128xf32>
    %100 = arith.addi %15, %18 : i32
    %c5_i32 = arith.constant 5 : i32
    %101 = arith.addi %100, %c5_i32 : i32
    %c16_i32_35 = arith.constant 16 : i32
    %102 = arith.cmpi slt, %101, %c16_i32_35 : i32
    %cst_36 = arith.constant 0.000000e+00 : f32
    %cst_37 = arith.constant 0xFF800000 : f32
    %103 = arith.select %102, %cst_36, %cst_37 : f32
    %104 = vector.extract_strided_slice %24 {offsets = [0, 5], sizes = [128, 1], strides = [1, 1]} : vector<128x8xf32> to vector<128x1xf32>
    %cst_38 = arith.constant 0.000000e+00 : f32
    %105 = vector.broadcast %cst_38 : f32 to vector<128x1xf32>
    %106 = arith.cmpf one, %104, %105 : vector<128x1xf32>
    %107 = vector.extract_strided_slice %23 {offsets = [5, 0], sizes = [1, 128], strides = [1, 1]} : vector<8x128xf32> to vector<1x128xf32>
    %108 = vector.shape_cast %106 : vector<128x1xi1> to vector<128x1xi1>
    %109 = vector.broadcast %108 : vector<128x1xi1> to vector<128x128xi1>
    %110 = vector.shape_cast %107 : vector<1x128xf32> to vector<1x128xf32>
    %111 = vector.broadcast %110 : vector<1x128xf32> to vector<128x128xf32>
    %112 = vector.broadcast %103 : f32 to vector<128x128xf32>
    %113 = arith.select %109, %111, %112 : vector<128x128xi1>, vector<128x128xf32>
    %114 = arith.maximumf %99, %113 : vector<128x128xf32>
    %115 = arith.addi %15, %18 : i32
    %c6_i32 = arith.constant 6 : i32
    %116 = arith.addi %115, %c6_i32 : i32
    %c16_i32_39 = arith.constant 16 : i32
    %117 = arith.cmpi slt, %116, %c16_i32_39 : i32
    %cst_40 = arith.constant 0.000000e+00 : f32
    %cst_41 = arith.constant 0xFF800000 : f32
    %118 = arith.select %117, %cst_40, %cst_41 : f32
    %119 = vector.extract_strided_slice %24 {offsets = [0, 6], sizes = [128, 1], strides = [1, 1]} : vector<128x8xf32> to vector<128x1xf32>
    %cst_42 = arith.constant 0.000000e+00 : f32
    %120 = vector.broadcast %cst_42 : f32 to vector<128x1xf32>
    %121 = arith.cmpf one, %119, %120 : vector<128x1xf32>
    %122 = vector.extract_strided_slice %23 {offsets = [6, 0], sizes = [1, 128], strides = [1, 1]} : vector<8x128xf32> to vector<1x128xf32>
    %123 = vector.shape_cast %121 : vector<128x1xi1> to vector<128x1xi1>
    %124 = vector.broadcast %123 : vector<128x1xi1> to vector<128x128xi1>
    %125 = vector.shape_cast %122 : vector<1x128xf32> to vector<1x128xf32>
    %126 = vector.broadcast %125 : vector<1x128xf32> to vector<128x128xf32>
    %127 = vector.broadcast %118 : f32 to vector<128x128xf32>
    %128 = arith.select %124, %126, %127 : vector<128x128xi1>, vector<128x128xf32>
    %129 = arith.maximumf %114, %128 : vector<128x128xf32>
    %130 = arith.addi %15, %18 : i32
    %c7_i32 = arith.constant 7 : i32
    %131 = arith.addi %130, %c7_i32 : i32
    %c16_i32_43 = arith.constant 16 : i32
    %132 = arith.cmpi slt, %131, %c16_i32_43 : i32
    %cst_44 = arith.constant 0.000000e+00 : f32
    %cst_45 = arith.constant 0xFF800000 : f32
    %133 = arith.select %132, %cst_44, %cst_45 : f32
    %134 = vector.extract_strided_slice %24 {offsets = [0, 7], sizes = [128, 1], strides = [1, 1]} : vector<128x8xf32> to vector<128x1xf32>
    %cst_46 = arith.constant 0.000000e+00 : f32
    %135 = vector.broadcast %cst_46 : f32 to vector<128x1xf32>
    %136 = arith.cmpf one, %134, %135 : vector<128x1xf32>
    %137 = vector.extract_strided_slice %23 {offsets = [7, 0], sizes = [1, 128], strides = [1, 1]} : vector<8x128xf32> to vector<1x128xf32>
    %138 = vector.shape_cast %136 : vector<128x1xi1> to vector<128x1xi1>
    %139 = vector.broadcast %138 : vector<128x1xi1> to vector<128x128xi1>
    %140 = vector.shape_cast %137 : vector<1x128xf32> to vector<1x128xf32>
    %141 = vector.broadcast %140 : vector<1x128xf32> to vector<128x128xf32>
    %142 = vector.broadcast %133 : f32 to vector<128x128xf32>
    %143 = arith.select %139, %141, %142 : vector<128x128xi1>, vector<128x128xf32>
    %144 = arith.maximumf %129, %143 : vector<128x128xf32>
    %c1_i32_47 = arith.constant 1 : i32
    %c8_i32_48 = arith.constant 8 : i32
    %145 = arith.muli %c1_i32_47, %c8_i32_48 : i32
    %146 = tpu.assume_multiple %145, 8 : i32
    %147 = arith.index_cast %146 : i32 to index
    %c0_49 = arith.constant 0 : index
    %148 = vector.load %arg2[%147, %c0_49] : memref<16x128xbf16, #tpu.memory_space<vmem>>, vector<8x128xbf16>
    %149 = arith.index_cast %146 : i32 to index
    %c0_50 = arith.constant 0 : index
    %150 = vector.load %arg3[%149, %c0_50] : memref<16x128xbf16, #tpu.memory_space<vmem>>, vector<8x128xbf16>
    %151 = arith.extf %150 : vector<8x128xbf16> to vector<8x128xf32>
    %cst_51 = arith.constant dense<0.000000e+00> : vector<128x8xf32>
    %152 = tpu.matmul %148, %14, %cst_51 {dimension_numbers = #tpu.dot_dimension_numbers<[0], [0], [1], [1], [0, 1, 1, 1], [], []>} : vector<8x128xbf16>, vector<8x8xbf16>, vector<128x8xf32> -> vector<128x8xf32>
    %153 = arith.addi %15, %146 : i32
    %c0_i32_52 = arith.constant 0 : i32
    %154 = arith.addi %153, %c0_i32_52 : i32
    %c16_i32_53 = arith.constant 16 : i32
    %155 = arith.cmpi slt, %154, %c16_i32_53 : i32
    %cst_54 = arith.constant 0.000000e+00 : f32
    %cst_55 = arith.constant 0xFF800000 : f32
    %156 = arith.select %155, %cst_54, %cst_55 : f32
    %157 = vector.extract_strided_slice %152 {offsets = [0, 0], sizes = [128, 1], strides = [1, 1]} : vector<128x8xf32> to vector<128x1xf32>
    %cst_56 = arith.constant 0.000000e+00 : f32
    %158 = vector.broadcast %cst_56 : f32 to vector<128x1xf32>
    %159 = arith.cmpf one, %157, %158 : vector<128x1xf32>
    %160 = vector.extract_strided_slice %151 {offsets = [0, 0], sizes = [1, 128], strides = [1, 1]} : vector<8x128xf32> to vector<1x128xf32>
    %161 = vector.shape_cast %159 : vector<128x1xi1> to vector<128x1xi1>
    %162 = vector.broadcast %161 : vector<128x1xi1> to vector<128x128xi1>
    %163 = vector.shape_cast %160 : vector<1x128xf32> to vector<1x128xf32>
    %164 = vector.broadcast %163 : vector<1x128xf32> to vector<128x128xf32>
    %165 = vector.broadcast %156 : f32 to vector<128x128xf32>
    %166 = arith.select %162, %164, %165 : vector<128x128xi1>, vector<128x128xf32>
    %167 = arith.maximumf %144, %166 : vector<128x128xf32>
    %168 = arith.addi %15, %146 : i32
    %c1_i32_57 = arith.constant 1 : i32
    %169 = arith.addi %168, %c1_i32_57 : i32
    %c16_i32_58 = arith.constant 16 : i32
    %170 = arith.cmpi slt, %169, %c16_i32_58 : i32
    %cst_59 = arith.constant 0.000000e+00 : f32
    %cst_60 = arith.constant 0xFF800000 : f32
    %171 = arith.select %170, %cst_59, %cst_60 : f32
    %172 = vector.extract_strided_slice %152 {offsets = [0, 1], sizes = [128, 1], strides = [1, 1]} : vector<128x8xf32> to vector<128x1xf32>
    %cst_61 = arith.constant 0.000000e+00 : f32
    %173 = vector.broadcast %cst_61 : f32 to vector<128x1xf32>
    %174 = arith.cmpf one, %172, %173 : vector<128x1xf32>
    %175 = vector.extract_strided_slice %151 {offsets = [1, 0], sizes = [1, 128], strides = [1, 1]} : vector<8x128xf32> to vector<1x128xf32>
    %176 = vector.shape_cast %174 : vector<128x1xi1> to vector<128x1xi1>
    %177 = vector.broadcast %176 : vector<128x1xi1> to vector<128x128xi1>
    %178 = vector.shape_cast %175 : vector<1x128xf32> to vector<1x128xf32>
    %179 = vector.broadcast %178 : vector<1x128xf32> to vector<128x128xf32>
    %180 = vector.broadcast %171 : f32 to vector<128x128xf32>
    %181 = arith.select %177, %179, %180 : vector<128x128xi1>, vector<128x128xf32>
    %182 = arith.maximumf %167, %181 : vector<128x128xf32>
    %183 = arith.addi %15, %146 : i32
    %c2_i32_62 = arith.constant 2 : i32
    %184 = arith.addi %183, %c2_i32_62 : i32
    %c16_i32_63 = arith.constant 16 : i32
    %185 = arith.cmpi slt, %184, %c16_i32_63 : i32
    %cst_64 = arith.constant 0.000000e+00 : f32
    %cst_65 = arith.constant 0xFF800000 : f32
    %186 = arith.select %185, %cst_64, %cst_65 : f32
    %187 = vector.extract_strided_slice %152 {offsets = [0, 2], sizes = [128, 1], strides = [1, 1]} : vector<128x8xf32> to vector<128x1xf32>
    %cst_66 = arith.constant 0.000000e+00 : f32
    %188 = vector.broadcast %cst_66 : f32 to vector<128x1xf32>
    %189 = arith.cmpf one, %187, %188 : vector<128x1xf32>
    %190 = vector.extract_strided_slice %151 {offsets = [2, 0], sizes = [1, 128], strides = [1, 1]} : vector<8x128xf32> to vector<1x128xf32>
    %191 = vector.shape_cast %189 : vector<128x1xi1> to vector<128x1xi1>
    %192 = vector.broadcast %191 : vector<128x1xi1> to vector<128x128xi1>
    %193 = vector.shape_cast %190 : vector<1x128xf32> to vector<1x128xf32>
    %194 = vector.broadcast %193 : vector<1x128xf32> to vector<128x128xf32>
    %195 = vector.broadcast %186 : f32 to vector<128x128xf32>
    %196 = arith.select %192, %194, %195 : vector<128x128xi1>, vector<128x128xf32>
    %197 = arith.maximumf %182, %196 : vector<128x128xf32>
    %198 = arith.addi %15, %146 : i32
    %c3_i32_67 = arith.constant 3 : i32
    %199 = arith.addi %198, %c3_i32_67 : i32
    %c16_i32_68 = arith.constant 16 : i32
    %200 = arith.cmpi slt, %199, %c16_i32_68 : i32
    %cst_69 = arith.constant 0.000000e+00 : f32
    %cst_70 = arith.constant 0xFF800000 : f32
    %201 = arith.select %200, %cst_69, %cst_70 : f32
    %202 = vector.extract_strided_slice %152 {offsets = [0, 3], sizes = [128, 1], strides = [1, 1]} : vector<128x8xf32> to vector<128x1xf32>
    %cst_71 = arith.constant 0.000000e+00 : f32
    %203 = vector.broadcast %cst_71 : f32 to vector<128x1xf32>
    %204 = arith.cmpf one, %202, %203 : vector<128x1xf32>
    %205 = vector.extract_strided_slice %151 {offsets = [3, 0], sizes = [1, 128], strides = [1, 1]} : vector<8x128xf32> to vector<1x128xf32>
    %206 = vector.shape_cast %204 : vector<128x1xi1> to vector<128x1xi1>
    %207 = vector.broadcast %206 : vector<128x1xi1> to vector<128x128xi1>
    %208 = vector.shape_cast %205 : vector<1x128xf32> to vector<1x128xf32>
    %209 = vector.broadcast %208 : vector<1x128xf32> to vector<128x128xf32>
    %210 = vector.broadcast %201 : f32 to vector<128x128xf32>
    %211 = arith.select %207, %209, %210 : vector<128x128xi1>, vector<128x128xf32>
    %212 = arith.maximumf %197, %211 : vector<128x128xf32>
    %213 = arith.addi %15, %146 : i32
    %c4_i32_72 = arith.constant 4 : i32
    %214 = arith.addi %213, %c4_i32_72 : i32
    %c16_i32_73 = arith.constant 16 : i32
    %215 = arith.cmpi slt, %214, %c16_i32_73 : i32
    %cst_74 = arith.constant 0.000000e+00 : f32
    %cst_75 = arith.constant 0xFF800000 : f32
    %216 = arith.select %215, %cst_74, %cst_75 : f32
    %217 = vector.extract_strided_slice %152 {offsets = [0, 4], sizes = [128, 1], strides = [1, 1]} : vector<128x8xf32> to vector<128x1xf32>
    %cst_76 = arith.constant 0.000000e+00 : f32
    %218 = vector.broadcast %cst_76 : f32 to vector<128x1xf32>
    %219 = arith.cmpf one, %217, %218 : vector<128x1xf32>
    %220 = vector.extract_strided_slice %151 {offsets = [4, 0], sizes = [1, 128], strides = [1, 1]} : vector<8x128xf32> to vector<1x128xf32>
    %221 = vector.shape_cast %219 : vector<128x1xi1> to vector<128x1xi1>
    %222 = vector.broadcast %221 : vector<128x1xi1> to vector<128x128xi1>
    %223 = vector.shape_cast %220 : vector<1x128xf32> to vector<1x128xf32>
    %224 = vector.broadcast %223 : vector<1x128xf32> to vector<128x128xf32>
    %225 = vector.broadcast %216 : f32 to vector<128x128xf32>
    %226 = arith.select %222, %224, %225 : vector<128x128xi1>, vector<128x128xf32>
    %227 = arith.maximumf %212, %226 : vector<128x128xf32>
    %228 = arith.addi %15, %146 : i32
    %c5_i32_77 = arith.constant 5 : i32
    %229 = arith.addi %228, %c5_i32_77 : i32
    %c16_i32_78 = arith.constant 16 : i32
    %230 = arith.cmpi slt, %229, %c16_i32_78 : i32
    %cst_79 = arith.constant 0.000000e+00 : f32
    %cst_80 = arith.constant 0xFF800000 : f32
    %231 = arith.select %230, %cst_79, %cst_80 : f32
    %232 = vector.extract_strided_slice %152 {offsets = [0, 5], sizes = [128, 1], strides = [1, 1]} : vector<128x8xf32> to vector<128x1xf32>
    %cst_81 = arith.constant 0.000000e+00 : f32
    %233 = vector.broadcast %cst_81 : f32 to vector<128x1xf32>
    %234 = arith.cmpf one, %232, %233 : vector<128x1xf32>
    %235 = vector.extract_strided_slice %151 {offsets = [5, 0], sizes = [1, 128], strides = [1, 1]} : vector<8x128xf32> to vector<1x128xf32>
    %236 = vector.shape_cast %234 : vector<128x1xi1> to vector<128x1xi1>
    %237 = vector.broadcast %236 : vector<128x1xi1> to vector<128x128xi1>
    %238 = vector.shape_cast %235 : vector<1x128xf32> to vector<1x128xf32>
    %239 = vector.broadcast %238 : vector<1x128xf32> to vector<128x128xf32>
    %240 = vector.broadcast %231 : f32 to vector<128x128xf32>
    %241 = arith.select %237, %239, %240 : vector<128x128xi1>, vector<128x128xf32>
    %242 = arith.maximumf %227, %241 : vector<128x128xf32>
    %243 = arith.addi %15, %146 : i32
    %c6_i32_82 = arith.constant 6 : i32
    %244 = arith.addi %243, %c6_i32_82 : i32
    %c16_i32_83 = arith.constant 16 : i32
    %245 = arith.cmpi slt, %244, %c16_i32_83 : i32
    %cst_84 = arith.constant 0.000000e+00 : f32
    %cst_85 = arith.constant 0xFF800000 : f32
    %246 = arith.select %245, %cst_84, %cst_85 : f32
    %247 = vector.extract_strided_slice %152 {offsets = [0, 6], sizes = [128, 1], strides = [1, 1]} : vector<128x8xf32> to vector<128x1xf32>
    %cst_86 = arith.constant 0.000000e+00 : f32
    %248 = vector.broadcast %cst_86 : f32 to vector<128x1xf32>
    %249 = arith.cmpf one, %247, %248 : vector<128x1xf32>
    %250 = vector.extract_strided_slice %151 {offsets = [6, 0], sizes = [1, 128], strides = [1, 1]} : vector<8x128xf32> to vector<1x128xf32>
    %251 = vector.shape_cast %249 : vector<128x1xi1> to vector<128x1xi1>
    %252 = vector.broadcast %251 : vector<128x1xi1> to vector<128x128xi1>
    %253 = vector.shape_cast %250 : vector<1x128xf32> to vector<1x128xf32>
    %254 = vector.broadcast %253 : vector<1x128xf32> to vector<128x128xf32>
    %255 = vector.broadcast %246 : f32 to vector<128x128xf32>
    %256 = arith.select %252, %254, %255 : vector<128x128xi1>, vector<128x128xf32>
    %257 = arith.maximumf %242, %256 : vector<128x128xf32>
    %258 = arith.addi %15, %146 : i32
    %c7_i32_87 = arith.constant 7 : i32
    %259 = arith.addi %258, %c7_i32_87 : i32
    %c16_i32_88 = arith.constant 16 : i32
    %260 = arith.cmpi slt, %259, %c16_i32_88 : i32
    %cst_89 = arith.constant 0.000000e+00 : f32
    %cst_90 = arith.constant 0xFF800000 : f32
    %261 = arith.select %260, %cst_89, %cst_90 : f32
    %262 = vector.extract_strided_slice %152 {offsets = [0, 7], sizes = [128, 1], strides = [1, 1]} : vector<128x8xf32> to vector<128x1xf32>
    %cst_91 = arith.constant 0.000000e+00 : f32
    %263 = vector.broadcast %cst_91 : f32 to vector<128x1xf32>
    %264 = arith.cmpf one, %262, %263 : vector<128x1xf32>
    %265 = vector.extract_strided_slice %151 {offsets = [7, 0], sizes = [1, 128], strides = [1, 1]} : vector<8x128xf32> to vector<1x128xf32>
    %266 = vector.shape_cast %264 : vector<128x1xi1> to vector<128x1xi1>
    %267 = vector.broadcast %266 : vector<128x1xi1> to vector<128x128xi1>
    %268 = vector.shape_cast %265 : vector<1x128xf32> to vector<1x128xf32>
    %269 = vector.broadcast %268 : vector<1x128xf32> to vector<128x128xf32>
    %270 = vector.broadcast %261 : f32 to vector<128x128xf32>
    %271 = arith.select %267, %269, %270 : vector<128x128xi1>, vector<128x128xf32>
    %272 = arith.maximumf %257, %271 : vector<128x128xf32>
    %c2_i32_92 = arith.constant 2 : i32
    %c0_93 = arith.constant 0 : index
    %c0_94 = arith.constant 0 : index
    %273 = vector.load %arg6[%c0_93, %c0_94] : memref<128x128xf32, #tpu.memory_space<vmem>>, vector<128x128xf32>
    tpu.vector_store %arg6[%c0_93, %c0_94], %272 {strides = array<i32>} : memref<128x128xf32, #tpu.memory_space<vmem>>, vector<128x128xf32>,
    %c0_i32_95 = arith.constant 0 : i32
    %274 = arith.cmpi eq, %arg1, %c0_i32_95 : i32
    %275 = arith.extui %274 : i1 to i32
    %c0_i32_96 = arith.constant 0 : i32
    %276 = arith.cmpi ne, %275, %c0_i32_96 : i32
    scf.if %276 {
      %c0_97 = arith.constant 0 : index
      %c0_98 = arith.constant 0 : index
      %277 = vector.load %arg5[%c0_97, %c0_98] : memref<128x128xf32, #tpu.memory_space<vmem>>, vector<128x128xf32>
      %cst_99 = arith.constant 6.250000e-02 : f32
      %278 = vector.broadcast %cst_99 : f32 to vector<128x128xf32>
      %279 = arith.mulf %277, %278 : vector<128x128xf32>
      %c0_100 = arith.constant 0 : index
      %c0_101 = arith.constant 0 : index
      %280 = vector.load %arg4[%c0_100, %c0_101] : memref<128x256xf32, #tpu.memory_space<vmem>>, vector<128x128xf32>
      tpu.vector_store %arg4[%c0_100, %c0_101], %279 {strides = array<i32>} : memref<128x256xf32, #tpu.memory_space<vmem>>, vector<128x128xf32>,
      %c0_102 = arith.constant 0 : index
      %c0_103 = arith.constant 0 : index
      %281 = vector.load %arg6[%c0_102, %c0_103] : memref<128x128xf32, #tpu.memory_space<vmem>>, vector<128x128xf32>
      %c0_104 = arith.constant 0 : index
      %c128 = arith.constant 128 : index
      %282 = vector.load %arg4[%c0_104, %c128] : memref<128x256xf32, #tpu.memory_space<vmem>>, vector<128x128xf32>
      tpu.vector_store %arg4[%c0_104, %c128], %281 {strides = array<i32>} : memref<128x256xf32, #tpu.memory_space<vmem>>, vector<128x128xf32>,
    } else {
    }
    return
  }
  func.func @transform_0(%arg0: i32, %arg1: i32) -> (i32, i32) {
    %c0_i32 = arith.constant 0 : i32
    return %arg1, %arg0 : i32, i32
  }
  func.func @transform_1(%arg0: i32, %arg1: i32) -> (i32, i32) {
    %c0_i32 = arith.constant 0 : i32
    %c0_i32_0 = arith.constant 0 : i32
    return %arg1, %c0_i32 : i32, i32
  }
  func.func @transform_2(%arg0: i32, %arg1: i32) -> (i32, i32) {
    %c0_i32 = arith.constant 0 : i32
    %c0_i32_0 = arith.constant 0 : i32
    return %arg0, %c0_i32 : i32, i32
  }
}

</mosaic_0001>

<llo_original>
// kernel: tpu_custom_call.1
$region0: #{tpu_custom_call.1}
  #allocation0 [shape = 'u32[]', space=smem, size = 0x4, offset = 0x4, fixed_abs, tag = 'smem constant byte address 0x4 - core index']
  #allocation1 [shape = 'u32[72,128]{1,0:T(1,128)}', space=vmem, size = 0x9000, scoped, tag = 'internal scratch']
  #allocation2 [shape = 'f32[128,128]{1,0:T(8,128)}', space=vmem, size = 0x10000, scoped, tag = 'scratch operand']
  #allocation3 [shape = 'f32[128,128]{1,0:T(8,128)}', space=vmem, size = 0x10000, scoped, tag = 'scratch operand']
  %s0 = inlined_call_operand.hbm [shape: bf16[16,128], index: 0, kind: input, shape index: {}]
  %s1 = inlined_call_operand.hbm [shape: bf16[16,128], index: 1, kind: input, shape index: {}]
  %s2 = inlined_call_operand.hbm [shape: f32[128,256], index: 2, kind: output, shape index: {}]
  %s3 = sld [smem:[#allocation0]]
  $region34: #{tpu_custom_call.1} parent=0
    _
  %s5 = ssub.s32 1, %s3
  %s6 = scalar_select 0, %s5, %s3
  $region1: #{tpu_custom_call.1} parent=0
    #allocation4 [shape = 'u8[4096]{0}', space=vmem, size = 0x1000, scoped, tag = 'input window, operand 0, single buffered']
    #allocation5 [shape = 's32[1]{0}', space=sflag, size = 0x4, scoped, tag = 'scoped memory for tpu_custom_call.1']
    #allocation6 [shape = 's32[1]{0}', space=sflag, size = 0x4, scoped, tag = 'scoped memory for tpu_custom_call.1']
    #allocation7 [shape = 'u8[4096]{0}', space=vmem, size = 0x1000, scoped, tag = 'input window, operand 1, single buffered']
    #allocation8 [shape = 's32[1]{0}', space=sflag, size = 0x4, scoped, tag = 'scoped memory for tpu_custom_call.1']
    #allocation9 [shape = 'u8[131072]{0}', space=vmem, size = 0x20000, scoped, tag = 'output window, operand 0, single buffered']
    %7 = vsyncpa [#allocation5], 0
    %8 = vsyncpa [#allocation8], 0
    %9 = vsyncpa [#allocation6], 0
    // Predicated region
    $region2: #{tpu_custom_call.1} parent=1 // pred_check
      _
    $region3: #{tpu_custom_call.1} parent=1 // pred_check_branch
      %11 = sbr.rel (0) target = $region5
    $region4: #{tpu_custom_call.1} parent=1 // pred_region
      %13 = vsyncadd [#allocation5], 0
      %s14 = sshll.u32 %s0, 4
      %s15 = int_to_ptr.hbm [resolvable:$true] %s14
      %s16 = sshll.u32 [#allocation4], 4
      %s17 = int_to_ptr.vmem [resolvable:$true] %s16
      %22 = dma.hbm_to_vmem [thread:$0]  %s15, 128, %s17, [#allocation5], 64, 64, 4
    $region5: #{tpu_custom_call.1} parent=1 // pred_fallthru
      _
    // Predicated region
    $region6: #{tpu_custom_call.1} parent=1 // pred_check
      _
    $region7: #{tpu_custom_call.1} parent=1 // pred_check_branch
      %24 = sbr.rel (0) target = $region9
    $region8: #{tpu_custom_call.1} parent=1 // pred_region
      %26 = vsyncadd [#allocation8], 0
      %s27 = sshll.u32 %s1, 4
      %s28 = int_to_ptr.hbm [resolvable:$true] %s27
      %s29 = sshll.u32 [#allocation7], 4
      %s30 = int_to_ptr.vmem [resolvable:$true] %s29
      %35 = dma.hbm_to_vmem [thread:$0]  %s28, 128, %s30, [#allocation8], 64, 64, 4
    $region9: #{tpu_custom_call.1} parent=1 // pred_fallthru
      _
    // Predicated region
    $region10: #{tpu_custom_call.1} parent=1 // pred_check
      _
    $region11: #{tpu_custom_call.1} parent=1 // pred_check_branch
      %37 = sbr.rel (0) target = $region13
    $region12: #{tpu_custom_call.1} parent=1 // pred_region
      %39 = dma.done [#allocation5], 128
    $region13: #{tpu_custom_call.1} parent=1 // pred_fallthru
      _
    // Predicated region
    $region14: #{tpu_custom_call.1} parent=1 // pred_check
      _
    $region15: #{tpu_custom_call.1} parent=1 // pred_check_branch
      %41 = sbr.rel (0) target = $region17
    $region16: #{tpu_custom_call.1} parent=1 // pred_region
      %43 = dma.done [#allocation8], 128
    $region17: #{tpu_custom_call.1} parent=1 // pred_fallthru
      _
    %p45 = scmp.eq.s32.totalorder 0, 0
    // Predicated region
    $region18: #{tpu_custom_call.1} parent=1 // pred_check
      %p46 = pneg %p45
    $region19: #{tpu_custom_call.1} parent=1 // pred_check_branch
      %48 = sbr.rel (%p46) target = $region21
    $region20: #{tpu_custom_call.1} parent=1 // pred_region
      %49 = vst [vmem:[#allocation2] sm:$0xff] 0.0
      %50 = vst [vmem:[#allocation2 + $0x8] sm:$0xff] 0.0
      %51 = vst [vmem:[#allocation2 + $0x10] sm:$0xff] 0.0
      %52 = vst [vmem:[#allocation2 + $0x18] sm:$0xff] 0.0
      %53 = vst [vmem:[#allocation2 + $0x20] sm:$0xff] 0.0
      %54 = vst [vmem:[#allocation2 + $0x28] sm:$0xff] 0.0
      %55 = vst [vmem:[#allocation2 + $0x30] sm:$0xff] 0.0
      %56 = vst [vmem:[#allocation2 + $0x38] sm:$0xff] 0.0
      %57 = vst [vmem:[#allocation2 + $0x40] sm:$0xff] 0.0
      %58 = vst [vmem:[#allocation2 + $0x48] sm:$0xff] 0.0
      %59 = vst [vmem:[#allocation2 + $0x50] sm:$0xff] 0.0
      %60 = vst [vmem:[#allocation2 + $0x58] sm:$0xff] 0.0
      %61 = vst [vmem:[#allocation2 + $0x60] sm:$0xff] 0.0
      %62 = vst [vmem:[#allocation2 + $0x68] sm:$0xff] 0.0
      %63 = vst [vmem:[#allocation2 + $0x70] sm:$0xff] 0.0
      %64 = vst [vmem:[#allocation2 + $0x78] sm:$0xff] 0.0
      %65 = vst [vmem:[#allocation3] sm:$0xff] -inf
      %66 = vst [vmem:[#allocation3 + $0x8] sm:$0xff] -inf
      %67 = vst [vmem:[#allocation3 + $0x10] sm:$0xff] -inf
      %68 = vst [vmem:[#allocation3 + $0x18] sm:$0xff] -inf
      %69 = vst [vmem:[#allocation3 + $0x20] sm:$0xff] -inf
      %70 = vst [vmem:[#allocation3 + $0x28] sm:$0xff] -inf
      %71 = vst [vmem:[#allocation3 + $0x30] sm:$0xff] -inf
      %72 = vst [vmem:[#allocation3 + $0x38] sm:$0xff] -inf
      %73 = vst [vmem:[#allocation3 + $0x40] sm:$0xff] -inf
      %74 = vst [vmem:[#allocation3 + $0x48] sm:$0xff] -inf
      %75 = vst [vmem:[#allocation3 + $0x50] sm:$0xff] -inf
      %76 = vst [vmem:[#allocation3 + $0x58] sm:$0xff] -inf
      %77 = vst [vmem:[#allocation3 + $0x60] sm:$0xff] -inf
      %78 = vst [vmem:[#allocation3 + $0x68] sm:$0xff] -inf
      %79 = vst [vmem:[#allocation3 + $0x70] sm:$0xff] -inf
      %80 = vst [vmem:[#allocation3 + $0x78] sm:$0xff] -inf
    $region21: #{tpu_custom_call.1} parent=1 // pred_fallthru
      _
    %v81 = vld [vmem:[#allocation4] sm:$0xf]
    %v82 = vld [vmem:[#allocation4 + $0x4] sm:$0xf]
    %v83 = vld [vmem:[#allocation7] sm:$0xf]
    %v84 = vld [vmem:[#allocation7 + $0x4] sm:$0xf]
    %v85 = vld [vmem:[#allocation2] sm:$0xff]
    %v86 = vld [vmem:[#allocation2 + $0x8] sm:$0xff]
    %v87 = vld [vmem:[#allocation2 + $0x10] sm:$0xff]
    %v88 = vld [vmem:[#allocation2 + $0x18] sm:$0xff]
    %v89 = vld [vmem:[#allocation2 + $0x20] sm:$0xff]
    %v90 = vld [vmem:[#allocation2 + $0x28] sm:$0xff]
    %v91 = vld [vmem:[#allocation2 + $0x30] sm:$0xff]
    %v92 = vld [vmem:[#allocation2 + $0x38] sm:$0xff]
    %v93 = vld [vmem:[#allocation2 + $0x40] sm:$0xff]
    %v94 = vld [vmem:[#allocation2 + $0x48] sm:$0xff]
    %v95 = vld [vmem:[#allocation2 + $0x50] sm:$0xff]
    %v96 = vld [vmem:[#allocation2 + $0x58] sm:$0xff]
    %v97 = vld [vmem:[#allocation2 + $0x60] sm:$0xff]
    %v98 = vld [vmem:[#allocation2 + $0x68] sm:$0xff]
    %v99 = vld [vmem:[#allocation2 + $0x70] sm:$0xff]
    %v100 = vld [vmem:[#allocation2 + $0x78] sm:$0xff]
    %v103 = vunpack.c.l.b16 %v81
    %v104 = vunpack.c.l.b16 %v82
    %v105 = vpack.c.b16 %v104, %v103
    %107 = vxpose.xlu0.c.b16.start [1/8] %v105, 128
    %108 = vxpose.xlu0.c.b16.cont [2/8] 0, 128
    %109 = vxpose.xlu0.c.b16.cont [3/8] 0, 128
    %110 = vxpose.xlu0.c.b16.cont [4/8] 0, 128
    %111 = vxpose.xlu0.c.b16.cont [5/8] 0, 128
    %112 = vxpose.xlu0.c.b16.cont [6/8] 0, 128
    %113 = vxpose.xlu0.c.b16.cont [7/8] 0, 128
    %114 = vxpose.xlu0.c.b16.end [8/8] 0, 128
    %v115 = vpop.trf.xlu0
    %v116 = vpop.trf.xlu0
    %v117 = vpop.trf.xlu0
    %v118 = vpop.trf.xlu0
    %v119 = vpop.trf.xlu0
    %v120 = vpop.trf.xlu0
    %v121 = vpop.trf.xlu0
    %v122 = vpop.trf.xlu0
    %v125 = vunpack.c.l.b16 %v83
    %v126 = vunpack.c.l.b16 %v84
    %v127 = vpack.c.b16 %v126, %v125
    %vm129 = vcmask 130048
    %v131 = vsel %vm129, %v115, 0
    %v134 = vsel %vm129, %v116, 0
    %v137 = vsel %vm129, %v117, 0
    %v140 = vsel %vm129, %v118, 0
    %v143 = vsel %vm129, %v119, 0
    %v146 = vsel %vm129, %v120, 0
    %v149 = vsel %vm129, %v121, 0
    %v152 = vsel %vm129, %v122, 0
    %154 = vmatpush.bf16.msra.mxu0 0
    %155 = vmatpush.bf16.msra.mxu0 0
    %156 = vmatpush.bf16.msra.mxu0 0
    %157 = vmatpush.bf16.msra.mxu0 0
    %158 = vmatpush.bf16.msra.mxu0 0
    %159 = vmatpush.bf16.msra.mxu0 0
    %160 = vmatpush.bf16.msra.mxu0 0
    %161 = vmatpush.bf16.msra.mxu0 %v127
    %162 = vmatmul.bf16.gmra.mxu0 %v131
    %v163 = vpop.f32.mrf.mxu0
    %v164 = vadd.f32 0.0, %v163
    %v165 = vpop.f32.mrf.mxu0
    %v166 = vadd.f32 0.0, %v165
    %167 = vmatmul.bf16.gmra.mxu0 %v134
    %v168 = vpop.f32.mrf.mxu0
    %v169 = vadd.f32 0.0, %v168
    %v170 = vpop.f32.mrf.mxu0
    %v171 = vadd.f32 0.0, %v170
    %172 = vmatmul.bf16.gmra.mxu0 %v137
    %v173 = vpop.f32.mrf.mxu0
    %v174 = vadd.f32 0.0, %v173
    %v175 = vpop.f32.mrf.mxu0
    %v176 = vadd.f32 0.0, %v175
    %177 = vmatmul.bf16.gmra.mxu0 %v140
    %v178 = vpop.f32.mrf.mxu0
    %v179 = vadd.f32 0.0, %v178
    %v180 = vpop.f32.mrf.mxu0
    %v181 = vadd.f32 0.0, %v180
    %182 = vmatmul.bf16.gmra.mxu0 %v143
    %v183 = vpop.f32.mrf.mxu0
    %v184 = vadd.f32 0.0, %v183
    %v185 = vpop.f32.mrf.mxu0
    %v186 = vadd.f32 0.0, %v185
    %187 = vmatmul.bf16.gmra.mxu0 %v146
    %v188 = vpop.f32.mrf.mxu0
    %v189 = vadd.f32 0.0, %v188
    %v190 = vpop.f32.mrf.mxu0
    %v191 = vadd.f32 0.0, %v190
    %192 = vmatmul.bf16.gmra.mxu0 %v149
    %v193 = vpop.f32.mrf.mxu0
    %v194 = vadd.f32 0.0, %v193
    %v195 = vpop.f32.mrf.mxu0
    %v196 = vadd.f32 0.0, %v195
    %197 = vmatmul.bf16.gmra.mxu0 %v152
    %v198 = vpop.f32.mrf.mxu0
    %v199 = vadd.f32 0.0, %v198
    %v200 = vpop.f32.mrf.mxu0
    %v201 = vadd.f32 0.0, %v200
    %202 = vdwg.mxu0
    %v203 = vadd.f32 %v85, %v164
    %v204 = vadd.f32 %v86, %v166
    %v205 = vadd.f32 %v87, %v169
    %v206 = vadd.f32 %v88, %v171
    %v207 = vadd.f32 %v89, %v174
    %v208 = vadd.f32 %v90, %v176
    %v209 = vadd.f32 %v91, %v179
    %v210 = vadd.f32 %v92, %v181
    %v211 = vadd.f32 %v93, %v184
    %v212 = vadd.f32 %v94, %v186
    %v213 = vadd.f32 %v95, %v189
    %v214 = vadd.f32 %v96, %v191
    %v215 = vadd.f32 %v97, %v194
    %v216 = vadd.f32 %v98, %v196
    %v217 = vadd.f32 %v99, %v199
    %v218 = vadd.f32 %v100, %v201
    %219 = vst [vmem:[#allocation2] sm:$0xff] %v203
    %220 = vst [vmem:[#allocation2 + $0x8] sm:$0xff] %v204
    %221 = vst [vmem:[#allocation2 + $0x10] sm:$0xff] %v205
    %222 = vst [vmem:[#allocation2 + $0x18] sm:$0xff] %v206
    %223 = vst [vmem:[#allocation2 + $0x20] sm:$0xff] %v207
    %224 = vst [vmem:[#allocation2 + $0x28] sm:$0xff] %v208
    %225 = vst [vmem:[#allocation2 + $0x30] sm:$0xff] %v209
    %226 = vst [vmem:[#allocation2 + $0x38] sm:$0xff] %v210
    %227 = vst [vmem:[#allocation2 + $0x40] sm:$0xff] %v211
    %228 = vst [vmem:[#allocation2 + $0x48] sm:$0xff] %v212
    %229 = vst [vmem:[#allocation2 + $0x50] sm:$0xff] %v213
    %230 = vst [vmem:[#allocation2 + $0x58] sm:$0xff] %v214
    %231 = vst [vmem:[#allocation2 + $0x60] sm:$0xff] %v215
    %232 = vst [vmem:[#allocation2 + $0x68] sm:$0xff] %v216
    %233 = vst [vmem:[#allocation2 + $0x70] sm:$0xff] %v217
    %234 = vst [vmem:[#allocation2 + $0x78] sm:$0xff] %v218
    %v235 = vlaneseq
    %v236 = vshrl.u32 %v235, 7
    %v237 = vlaneseq
    %v238 = vand.u32 %v237, 127
    %vm239 = vcmp.eq.s32.totalorder %v236, %v238
    %v240 = vsel %vm239, 1, 0
    %v241 = vcvt.s32.f32 %v240
    %v242 = vpack.c.bf16 %v241, %v241
    %s243 = smul.u32 0, 16
    %v244 = vld [vmem:[#allocation3] sm:$0xff]
    %v245 = vld [vmem:[#allocation3 + $0x8] sm:$0xff]
    %v246 = vld [vmem:[#allocation3 + $0x10] sm:$0xff]
    %v247 = vld [vmem:[#allocation3 + $0x18] sm:$0xff]
    %v248 = vld [vmem:[#allocation3 + $0x20] sm:$0xff]
    %v249 = vld [vmem:[#allocation3 + $0x28] sm:$0xff]
    %v250 = vld [vmem:[#allocation3 + $0x30] sm:$0xff]
    %v251 = vld [vmem:[#allocation3 + $0x38] sm:$0xff]
    %v252 = vld [vmem:[#allocation3 + $0x40] sm:$0xff]
    %v253 = vld [vmem:[#allocation3 + $0x48] sm:$0xff]
    %v254 = vld [vmem:[#allocation3 + $0x50] sm:$0xff]
    %v255 = vld [vmem:[#allocation3 + $0x58] sm:$0xff]
    %v256 = vld [vmem:[#allocation3 + $0x60] sm:$0xff]
    %v257 = vld [vmem:[#allocation3 + $0x68] sm:$0xff]
    %v258 = vld [vmem:[#allocation3 + $0x70] sm:$0xff]
    %v259 = vld [vmem:[#allocation3 + $0x78] sm:$0xff]
    %v260 = vld [vmem:[#allocation4] sm:$0xf]
    %v261 = vld [vmem:[#allocation7] sm:$0xf]
    %v262 = vunpack.c.l.bf16 %v261
    %263 = vxpose.xlu0.c.b16.start [1/8] %v260, 128
    %264 = vxpose.xlu0.c.b16.cont [2/8] 0, 128
    %265 = vxpose.xlu0.c.b16.cont [3/8] 0, 128
    %266 = vxpose.xlu0.c.b16.cont [4/8] 0, 128
    %267 = vxpose.xlu0.c.b16.cont [5/8] 0, 128
    %268 = vxpose.xlu0.c.b16.cont [6/8] 0, 128
    %269 = vxpose.xlu0.c.b16.cont [7/8] 0, 128
    %270 = vxpose.xlu0.c.b16.end [8/8] 0, 128
    %v271 = vpop.trf.xlu0
    %v272 = vpop.trf.xlu0
    %v273 = vpop.trf.xlu0
    %v274 = vpop.trf.xlu0
    %v275 = vpop.trf.xlu0
    %v276 = vpop.trf.xlu0
    %v277 = vpop.trf.xlu0
    %v278 = vpop.trf.xlu0
    %vm279 = vcmask 64512
    %v281 = vsel %vm279, %v271, 0
    %v284 = vsel %vm279, %v272, 0
    %v287 = vsel %vm279, %v273, 0
    %v290 = vsel %vm279, %v274, 0
    %v293 = vsel %vm279, %v275, 0
    %v296 = vsel %vm279, %v276, 0
    %v299 = vsel %vm279, %v277, 0
    %v302 = vsel %vm279, %v278, 0
    %vm304 = vcmask 1043456
    %v306 = vsel %vm304, %v242, 0
    %308 = vmatpush.bf16.msra.mxu0 0
    %309 = vmatpush.bf16.msra.mxu0 0
    %310 = vmatpush.bf16.msra.mxu0 0
    %311 = vmatpush.bf16.msra.mxu0 0
    %312 = vmatpush.bf16.msra.mxu0 0
    %313 = vmatpush.bf16.msra.mxu0 0
    %314 = vmatpush.bf16.msra.mxu0 0
    %315 = vmatpush.bf16.msra.mxu0 %v306
    %316 = vmatmul.bf16.gmra.mxu0 %v281
    %v317 = vpop.f32.mrf.mxu0
    %v318 = vadd.f32 0.0, %v317
    %v319 = vpop.f32.mrf.mxu0
    %v320 = vadd.f32 0.0, %v319
    %321 = vmatmul.bf16.gmra.mxu0 %v284
    %v322 = vpop.f32.mrf.mxu0
    %v323 = vadd.f32 0.0, %v322
    %v324 = vpop.f32.mrf.mxu0
    %v325 = vadd.f32 0.0, %v324
    %326 = vmatmul.bf16.gmra.mxu0 %v287
    %v327 = vpop.f32.mrf.mxu0
    %v328 = vadd.f32 0.0, %v327
    %v329 = vpop.f32.mrf.mxu0
    %v330 = vadd.f32 0.0, %v329
    %331 = vmatmul.bf16.gmra.mxu0 %v290
    %v332 = vpop.f32.mrf.mxu0
    %v333 = vadd.f32 0.0, %v332
    %v334 = vpop.f32.mrf.mxu0
    %v335 = vadd.f32 0.0, %v334
    %336 = vmatmul.bf16.gmra.mxu0 %v293
    %v337 = vpop.f32.mrf.mxu0
    %v338 = vadd.f32 0.0, %v337
    %v339 = vpop.f32.mrf.mxu0
    %v340 = vadd.f32 0.0, %v339
    %341 = vmatmul.bf16.gmra.mxu0 %v296
    %v342 = vpop.f32.mrf.mxu0
    %v343 = vadd.f32 0.0, %v342
    %v344 = vpop.f32.mrf.mxu0
    %v345 = vadd.f32 0.0, %v344
    %346 = vmatmul.bf16.gmra.mxu0 %v299
    %v347 = vpop.f32.mrf.mxu0
    %v348 = vadd.f32 0.0, %v347
    %v349 = vpop.f32.mrf.mxu0
    %v350 = vadd.f32 0.0, %v349
    %351 = vmatmul.bf16.gmra.mxu0 %v302
    %v352 = vpop.f32.mrf.mxu0
    %v353 = vadd.f32 0.0, %v352
    %v354 = vpop.f32.mrf.mxu0
    %v355 = vadd.f32 0.0, %v354
    %356 = vdwg.mxu0
    %s357 = sadd.s32 %s243, 0
    %p358 = scmp.lt.s32.totalorder %s357, 16
    %s359 = scalar_select %p358, 0.0, -inf
    %vm360 = vcmp.ne.f32.partialorder %v318, 0.0
    %vm361 = vcmp.ne.f32.partialorder %v320, 0.0
    %vm362 = vcmp.ne.f32.partialorder %v323, 0.0
    %vm363 = vcmp.ne.f32.partialorder %v325, 0.0
    %vm364 = vcmp.ne.f32.partialorder %v328, 0.0
    %vm365 = vcmp.ne.f32.partialorder %v330, 0.0
    %vm366 = vcmp.ne.f32.partialorder %v333, 0.0
    %vm367 = vcmp.ne.f32.partialorder %v335, 0.0
    %vm368 = vcmp.ne.f32.partialorder %v338, 0.0
    %vm369 = vcmp.ne.f32.partialorder %v340, 0.0
    %vm370 = vcmp.ne.f32.partialorder %v343, 0.0
    %vm371 = vcmp.ne.f32.partialorder %v345, 0.0
    %vm372 = vcmp.ne.f32.partialorder %v348, 0.0
    %vm373 = vcmp.ne.f32.partialorder %v350, 0.0
    %vm374 = vcmp.ne.f32.partialorder %v353, 0.0
    %vm375 = vcmp.ne.f32.partialorder %v355, 0.0
    %v376 = vsel %vm360, 1, 0
    %v377 = vsel %vm361, 1, 0
    %v378 = vsel %vm362, 1, 0
    %v379 = vsel %vm363, 1, 0
    %v380 = vsel %vm364, 1, 0
    %v381 = vsel %vm365, 1, 0
    %v382 = vsel %vm366, 1, 0
    %v383 = vsel %vm367, 1, 0
    %v384 = vsel %vm368, 1, 0
    %v385 = vsel %vm369, 1, 0
    %v386 = vsel %vm370, 1, 0
    %v387 = vsel %vm371, 1, 0
    %v388 = vsel %vm372, 1, 0
    %v389 = vsel %vm373, 1, 0
    %v390 = vsel %vm374, 1, 0
    %v391 = vsel %vm375, 1, 0
    %392 = vset.pattern.permute.xlu0 0
    %393 = vperm.xlu0 %392, %v376
    %v394 = vpop.permute.xlu0 %393
    %395 = vset.pattern.permute.xlu0 0
    %396 = vperm.xlu0 %395, %v377
    %v397 = vpop.permute.xlu0 %396
    %398 = vset.pattern.permute.xlu0 0
    %399 = vperm.xlu0 %398, %v378
    %v400 = vpop.permute.xlu0 %399
    %401 = vset.pattern.permute.xlu0 0
    %402 = vperm.xlu0 %401, %v379
    %v403 = vpop.permute.xlu0 %402
    %404 = vset.pattern.permute.xlu0 0
    %405 = vperm.xlu0 %404, %v380
    %v406 = vpop.permute.xlu0 %405
    %407 = vset.pattern.permute.xlu0 0
    %408 = vperm.xlu0 %407, %v381
    %v409 = vpop.permute.xlu0 %408
    %410 = vset.pattern.permute.xlu0 0
    %411 = vperm.xlu0 %410, %v382
    %v412 = vpop.permute.xlu0 %411
    %413 = vset.pattern.permute.xlu0 0
    %414 = vperm.xlu0 %413, %v383
    %v415 = vpop.permute.xlu0 %414
    %416 = vset.pattern.permute.xlu0 0
    %417 = vperm.xlu0 %416, %v384
    %v418 = vpop.permute.xlu0 %417
    %419 = vset.pattern.permute.xlu0 0
    %420 = vperm.xlu0 %419, %v385
    %v421 = vpop.permute.xlu0 %420
    %422 = vset.pattern.permute.xlu0 0
    %423 = vperm.xlu0 %422, %v386
    %v424 = vpop.permute.xlu0 %423
    %425 = vset.pattern.permute.xlu0 0
    %426 = vperm.xlu0 %425, %v387
    %v427 = vpop.permute.xlu0 %426
    %428 = vset.pattern.permute.xlu0 0
    %429 = vperm.xlu0 %428, %v388
    %v430 = vpop.permute.xlu0 %429
    %431 = vset.pattern.permute.xlu0 0
    %432 = vperm.xlu0 %431, %v389
    %v433 = vpop.permute.xlu0 %432
    %434 = vset.pattern.permute.xlu0 0
    %435 = vperm.xlu0 %434, %v390
    %v436 = vpop.permute.xlu0 %435
    %437 = vset.pattern.permute.xlu0 0
    %438 = vperm.xlu0 %437, %v391
    %v439 = vpop.permute.xlu0 %438
    %vm440 = vcmp.eq.s32.totalorder %v394, 1
    %vm441 = vcmp.eq.s32.totalorder %v397, 1
    %vm442 = vcmp.eq.s32.totalorder %v400, 1
    %vm443 = vcmp.eq.s32.totalorder %v403, 1
    %vm444 = vcmp.eq.s32.totalorder %v406, 1
    %vm445 = vcmp.eq.s32.totalorder %v409, 1
    %vm446 = vcmp.eq.s32.totalorder %v412, 1
    %vm447 = vcmp.eq.s32.totalorder %v415, 1
    %vm448 = vcmp.eq.s32.totalorder %v418, 1
    %vm449 = vcmp.eq.s32.totalorder %v421, 1
    %vm450 = vcmp.eq.s32.totalorder %v424, 1
    %vm451 = vcmp.eq.s32.totalorder %v427, 1
    %vm452 = vcmp.eq.s32.totalorder %v430, 1
    %vm453 = vcmp.eq.s32.totalorder %v433, 1
    %vm454 = vcmp.eq.s32.totalorder %v436, 1
    %vm455 = vcmp.eq.s32.totalorder %v439, 1
    %v456 = vperm.slane %v262, 0
    %v457 = vstv %s359
    %v458 = vsel %vm440, %v456, %v457
    %v459 = vsel %vm441, %v456, %v457
    %v460 = vsel %vm442, %v456, %v457
    %v461 = vsel %vm443, %v456, %v457
    %v462 = vsel %vm444, %v456, %v457
    %v463 = vsel %vm445, %v456, %v457
    %v464 = vsel %vm446, %v456, %v457
    %v465 = vsel %vm447, %v456, %v457
    %v466 = vsel %vm448, %v456, %v457
    %v467 = vsel %vm449, %v456, %v457
    %v468 = vsel %vm450, %v456, %v457
    %v469 = vsel %vm451, %v456, %v457
    %v470 = vsel %vm452, %v456, %v457
    %v471 = vsel %vm453, %v456, %v457
    %v472 = vsel %vm454, %v456, %v457
    %v473 = vsel %vm455, %v456, %v457
    %v474 = vmax.f32 %v244, %v458
    %v475 = vmax.f32 %v245, %v459
    %v476 = vmax.f32 %v246, %v460
    %v477 = vmax.f32 %v247, %v461
    %v478 = vmax.f32 %v248, %v462
    %v479 = vmax.f32 %v249, %v463
    %v480 = vmax.f32 %v250, %v464
    %v481 = vmax.f32 %v251, %v465
    %v482 = vmax.f32 %v252, %v466
    %v483 = vmax.f32 %v253, %v467
    %v484 = vmax.f32 %v254, %v468
    %v485 = vmax.f32 %v255, %v469
    %v486 = vmax.f32 %v256, %v470
    %v487 = vmax.f32 %v257, %v471
    %v488 = vmax.f32 %v258, %v472
    %v489 = vmax.f32 %v259, %v473
    %s490 = sadd.s32 %s357, 1
    %p491 = scmp.lt.s32.totalorder %s490, 16
    %s492 = scalar_select %p491, 0.0, -inf
    %493 = vset.pattern.permute.xlu0 1
    %494 = vperm.xlu0 %493, %v376
    %v495 = vpop.permute.xlu0 %494
    %496 = vset.pattern.permute.xlu0 1
    %497 = vperm.xlu0 %496, %v377
    %v498 = vpop.permute.xlu0 %497
    %499 = vset.pattern.permute.xlu0 1
    %500 = vperm.xlu0 %499, %v378
    %v501 = vpop.permute.xlu0 %500
    %502 = vset.pattern.permute.xlu0 1
    %503 = vperm.xlu0 %502, %v379
    %v504 = vpop.permute.xlu0 %503
    %505 = vset.pattern.permute.xlu0 1
    %506 = vperm.xlu0 %505, %v380
    %v507 = vpop.permute.xlu0 %506
    %508 = vset.pattern.permute.xlu0 1
    %509 = vperm.xlu0 %508, %v381
    %v510 = vpop.permute.xlu0 %509
    %511 = vset.pattern.permute.xlu0 1
    %512 = vperm.xlu0 %511, %v382
    %v513 = vpop.permute.xlu0 %512
    %514 = vset.pattern.permute.xlu0 1
    %515 = vperm.xlu0 %514, %v383
    %v516 = vpop.permute.xlu0 %515
    %517 = vset.pattern.permute.xlu0 1
    %518 = vperm.xlu0 %517, %v384
    %v519 = vpop.permute.xlu0 %518
    %520 = vset.pattern.permute.xlu0 1
    %521 = vperm.xlu0 %520, %v385
    %v522 = vpop.permute.xlu0 %521
    %523 = vset.pattern.permute.xlu0 1
    %524 = vperm.xlu0 %523, %v386
    %v525 = vpop.permute.xlu0 %524
    %526 = vset.pattern.permute.xlu0 1
    %527 = vperm.xlu0 %526, %v387
    %v528 = vpop.permute.xlu0 %527
    %529 = vset.pattern.permute.xlu0 1
    %530 = vperm.xlu0 %529, %v388
    %v531 = vpop.permute.xlu0 %530
    %532 = vset.pattern.permute.xlu0 1
    %533 = vperm.xlu0 %532, %v389
    %v534 = vpop.permute.xlu0 %533
    %535 = vset.pattern.permute.xlu0 1
    %536 = vperm.xlu0 %535, %v390
    %v537 = vpop.permute.xlu0 %536
    %538 = vset.pattern.permute.xlu0 1
    %539 = vperm.xlu0 %538, %v391
    %v540 = vpop.permute.xlu0 %539
    %vm541 = vcmp.eq.s32.totalorder %v495, 1
    %vm542 = vcmp.eq.s32.totalorder %v498, 1
    %vm543 = vcmp.eq.s32.totalorder %v501, 1
    %vm544 = vcmp.eq.s32.totalorder %v504, 1
    %vm545 = vcmp.eq.s32.totalorder %v507, 1
    %vm546 = vcmp.eq.s32.totalorder %v510, 1
    %vm547 = vcmp.eq.s32.totalorder %v513, 1
    %vm548 = vcmp.eq.s32.totalorder %v516, 1
    %vm549 = vcmp.eq.s32.totalorder %v519, 1
    %vm550 = vcmp.eq.s32.totalorder %v522, 1
    %vm551 = vcmp.eq.s32.totalorder %v525, 1
    %vm552 = vcmp.eq.s32.totalorder %v528, 1
    %vm553 = vcmp.eq.s32.totalorder %v531, 1
    %vm554 = vcmp.eq.s32.totalorder %v534, 1
    %vm555 = vcmp.eq.s32.totalorder %v537, 1
    %vm556 = vcmp.eq.s32.totalorder %v540, 1
    %v557 = vperm.slane %v262, 1
    %v558 = vstv %s492
    %v559 = vsel %vm541, %v557, %v558
    %v560 = vsel %vm542, %v557, %v558
    %v561 = vsel %vm543, %v557, %v558
    %v562 = vsel %vm544, %v557, %v558
    %v563 = vsel %vm545, %v557, %v558
    %v564 = vsel %vm546, %v557, %v558
    %v565 = vsel %vm547, %v557, %v558
    %v566 = vsel %vm548, %v557, %v558
    %v567 = vsel %vm549, %v557, %v558
    %v568 = vsel %vm550, %v557, %v558
    %v569 = vsel %vm551, %v557, %v558
    %v570 = vsel %vm552, %v557, %v558
    %v571 = vsel %vm553, %v557, %v558
    %v572 = vsel %vm554, %v557, %v558
    %v573 = vsel %vm555, %v557, %v558
    %v574 = vsel %vm556, %v557, %v558
    %v575 = vmax.f32 %v474, %v559
    %v576 = vmax.f32 %v475, %v560
    %v577 = vmax.f32 %v476, %v561
    %v578 = vmax.f32 %v477, %v562
    %v579 = vmax.f32 %v478, %v563
    %v580 = vmax.f32 %v479, %v564
    %v581 = vmax.f32 %v480, %v565
    %v582 = vmax.f32 %v481, %v566
    %v583 = vmax.f32 %v482, %v567
    %v584 = vmax.f32 %v483, %v568
    %v585 = vmax.f32 %v484, %v569
    %v586 = vmax.f32 %v485, %v570
    %v587 = vmax.f32 %v486, %v571
    %v588 = vmax.f32 %v487, %v572
    %v589 = vmax.f32 %v488, %v573
    %v590 = vmax.f32 %v489, %v574
    %s591 = sadd.s32 %s357, 2
    %p592 = scmp.lt.s32.totalorder %s591, 16
    %s593 = scalar_select %p592, 0.0, -inf
    %594 = vset.pattern.permute.xlu0 2
    %595 = vperm.xlu0 %594, %v376
    %v596 = vpop.permute.xlu0 %595
    %597 = vset.pattern.permute.xlu0 2
    %598 = vperm.xlu0 %597, %v377
    %v599 = vpop.permute.xlu0 %598
    %600 = vset.pattern.permute.xlu0 2
    %601 = vperm.xlu0 %600, %v378
    %v602 = vpop.permute.xlu0 %601
    %603 = vset.pattern.permute.xlu0 2
    %604 = vperm.xlu0 %603, %v379
    %v605 = vpop.permute.xlu0 %604
    %606 = vset.pattern.permute.xlu0 2
    %607 = vperm.xlu0 %606, %v380
    %v608 = vpop.permute.xlu0 %607
    %609 = vset.pattern.permute.xlu0 2
    %610 = vperm.xlu0 %609, %v381
    %v611 = vpop.permute.xlu0 %610
    %612 = vset.pattern.permute.xlu0 2
    %613 = vperm.xlu0 %612, %v382
    %v614 = vpop.permute.xlu0 %613
    %615 = vset.pattern.permute.xlu0 2
    %616 = vperm.xlu0 %615, %v383
    %v617 = vpop.permute.xlu0 %616
    %618 = vset.pattern.permute.xlu0 2
    %619 = vperm.xlu0 %618, %v384
    %v620 = vpop.permute.xlu0 %619
    %621 = vset.pattern.permute.xlu0 2
    %622 = vperm.xlu0 %621, %v385
    %v623 = vpop.permute.xlu0 %622
    %624 = vset.pattern.permute.xlu0 2
    %625 = vperm.xlu0 %624, %v386
    %v626 = vpop.permute.xlu0 %625
    %627 = vset.pattern.permute.xlu0 2
    %628 = vperm.xlu0 %627, %v387
    %v629 = vpop.permute.xlu0 %628
    %630 = vset.pattern.permute.xlu0 2
    %631 = vperm.xlu0 %630, %v388
    %v632 = vpop.permute.xlu0 %631
    %633 = vset.pattern.permute.xlu0 2
    %634 = vperm.xlu0 %633, %v389
    %v635 = vpop.permute.xlu0 %634
    %636 = vset.pattern.permute.xlu0 2
    %637 = vperm.xlu0 %636, %v390
    %v638 = vpop.permute.xlu0 %637
    %639 = vset.pattern.permute.xlu0 2
    %640 = vperm.xlu0 %639, %v391
    %v641 = vpop.permute.xlu0 %640
    %vm642 = vcmp.eq.s32.totalorder %v596, 1
    %vm643 = vcmp.eq.s32.totalorder %v599, 1
    %vm644 = vcmp.eq.s32.totalorder %v602, 1
    %vm645 = vcmp.eq.s32.totalorder %v605, 1
    %vm646 = vcmp.eq.s32.totalorder %v608, 1
    %vm647 = vcmp.eq.s32.totalorder %v611, 1
    %vm648 = vcmp.eq.s32.totalorder %v614, 1
    %vm649 = vcmp.eq.s32.totalorder %v617, 1
    %vm650 = vcmp.eq.s32.totalorder %v620, 1
    %vm651 = vcmp.eq.s32.totalorder %v623, 1
    %vm652 = vcmp.eq.s32.totalorder %v626, 1
    %vm653 = vcmp.eq.s32.totalorder %v629, 1
    %vm654 = vcmp.eq.s32.totalorder %v632, 1
    %vm655 = vcmp.eq.s32.totalorder %v635, 1
    %vm656 = vcmp.eq.s32.totalorder %v638, 1
    %vm657 = vcmp.eq.s32.totalorder %v641, 1
    %v658 = vperm.slane %v262, 2
    %v659 = vstv %s593
    %v660 = vsel %vm642, %v658, %v659
    %v661 = vsel %vm643, %v658, %v659
    %v662 = vsel %vm644, %v658, %v659
    %v663 = vsel %vm645, %v658, %v659
    %v664 = vsel %vm646, %v658, %v659
    %v665 = vsel %vm647, %v658, %v659
    %v666 = vsel %vm648, %v658, %v659
    %v667 = vsel %vm649, %v658, %v659
    %v668 = vsel %vm650, %v658, %v659
    %v669 = vsel %vm651, %v658, %v659
    %v670 = vsel %vm652, %v658, %v659
    %v671 = vsel %vm653, %v658, %v659
    %v672 = vsel %vm654, %v658, %v659
    %v673 = vsel %vm655, %v658, %v659
    %v674 = vsel %vm656, %v658, %v659
    %v675 = vsel %vm657, %v658, %v659
    %v676 = vmax.f32 %v575, %v660
    %v677 = vmax.f32 %v576, %v661
    %v678 = vmax.f32 %v577, %v662
    %v679 = vmax.f32 %v578, %v663
    %v680 = vmax.f32 %v579, %v664
    %v681 = vmax.f32 %v580, %v665
    %v682 = vmax.f32 %v581, %v666
    %v683 = vmax.f32 %v582, %v667
    %v684 = vmax.f32 %v583, %v668
    %v685 = vmax.f32 %v584, %v669
    %v686 = vmax.f32 %v585, %v670
    %v687 = vmax.f32 %v586, %v671
    %v688 = vmax.f32 %v587, %v672
    %v689 = vmax.f32 %v588, %v673
    %v690 = vmax.f32 %v589, %v674
    %v691 = vmax.f32 %v590, %v675
    %s692 = sadd.s32 %s357, 3
    %p693 = scmp.lt.s32.totalorder %s692, 16
    %s694 = scalar_select %p693, 0.0, -inf
    %695 = vset.pattern.permute.xlu0 3
    %696 = vperm.xlu0 %695, %v376
    %v697 = vpop.permute.xlu0 %696
    %698 = vset.pattern.permute.xlu0 3
    %699 = vperm.xlu0 %698, %v377
    %v700 = vpop.permute.xlu0 %699
    %701 = vset.pattern.permute.xlu0 3
    %702 = vperm.xlu0 %701, %v378
    %v703 = vpop.permute.xlu0 %702
    %704 = vset.pattern.permute.xlu0 3
    %705 = vperm.xlu0 %704, %v379
    %v706 = vpop.permute.xlu0 %705
    %707 = vset.pattern.permute.xlu0 3
    %708 = vperm.xlu0 %707, %v380
    %v709 = vpop.permute.xlu0 %708
    %710 = vset.pattern.permute.xlu0 3
    %711 = vperm.xlu0 %710, %v381
    %v712 = vpop.permute.xlu0 %711
    %713 = vset.pattern.permute.xlu0 3
    %714 = vperm.xlu0 %713, %v382
    %v715 = vpop.permute.xlu0 %714
    %716 = vset.pattern.permute.xlu0 3
    %717 = vperm.xlu0 %716, %v383
    %v718 = vpop.permute.xlu0 %717
    %719 = vset.pattern.permute.xlu0 3
    %720 = vperm.xlu0 %719, %v384
    %v721 = vpop.permute.xlu0 %720
    %722 = vset.pattern.permute.xlu0 3
    %723 = vperm.xlu0 %722, %v385
    %v724 = vpop.permute.xlu0 %723
    %725 = vset.pattern.permute.xlu0 3
    %726 = vperm.xlu0 %725, %v386
    %v727 = vpop.permute.xlu0 %726
    %728 = vset.pattern.permute.xlu0 3
    %729 = vperm.xlu0 %728, %v387
    %v730 = vpop.permute.xlu0 %729
    %731 = vset.pattern.permute.xlu0 3
    %732 = vperm.xlu0 %731, %v388
    %v733 = vpop.permute.xlu0 %732
    %734 = vset.pattern.permute.xlu0 3
    %735 = vperm.xlu0 %734, %v389
    %v736 = vpop.permute.xlu0 %735
    %737 = vset.pattern.permute.xlu0 3
    %738 = vperm.xlu0 %737, %v390
    %v739 = vpop.permute.xlu0 %738
    %740 = vset.pattern.permute.xlu0 3
    %741 = vperm.xlu0 %740, %v391
    %v742 = vpop.permute.xlu0 %741
    %vm743 = vcmp.eq.s32.totalorder %v697, 1
    %vm744 = vcmp.eq.s32.totalorder %v700, 1
    %vm745 = vcmp.eq.s32.totalorder %v703, 1
    %vm746 = vcmp.eq.s32.totalorder %v706, 1
    %vm747 = vcmp.eq.s32.totalorder %v709, 1
    %vm748 = vcmp.eq.s32.totalorder %v712, 1
    %vm749 = vcmp.eq.s32.totalorder %v715, 1
    %vm750 = vcmp.eq.s32.totalorder %v718, 1
    %vm751 = vcmp.eq.s32.totalorder %v721, 1
    %vm752 = vcmp.eq.s32.totalorder %v724, 1
    %vm753 = vcmp.eq.s32.totalorder %v727, 1
    %vm754 = vcmp.eq.s32.totalorder %v730, 1
    %vm755 = vcmp.eq.s32.totalorder %v733, 1
    %vm756 = vcmp.eq.s32.totalorder %v736, 1
    %vm757 = vcmp.eq.s32.totalorder %v739, 1
    %vm758 = vcmp.eq.s32.totalorder %v742, 1
    %v759 = vperm.slane %v262, 3
    %v760 = vstv %s694
    %v761 = vsel %vm743, %v759, %v760
    %v762 = vsel %vm744, %v759, %v760
    %v763 = vsel %vm745, %v759, %v760
    %v764 = vsel %vm746, %v759, %v760
    %v765 = vsel %vm747, %v759, %v760
    %v766 = vsel %vm748, %v759, %v760
    %v767 = vsel %vm749, %v759, %v760
    %v768 = vsel %vm750, %v759, %v760
    %v769 = vsel %vm751, %v759, %v760
    %v770 = vsel %vm752, %v759, %v760
    %v771 = vsel %vm753, %v759, %v760
    %v772 = vsel %vm754, %v759, %v760
    %v773 = vsel %vm755, %v759, %v760
    %v774 = vsel %vm756, %v759, %v760
    %v775 = vsel %vm757, %v759, %v760
    %v776 = vsel %vm758, %v759, %v760
    %v777 = vmax.f32 %v676, %v761
    %v778 = vmax.f32 %v677, %v762
    %v779 = vmax.f32 %v678, %v763
    %v780 = vmax.f32 %v679, %v764
    %v781 = vmax.f32 %v680, %v765
    %v782 = vmax.f32 %v681, %v766
    %v783 = vmax.f32 %v682, %v767
    %v784 = vmax.f32 %v683, %v768
    %v785 = vmax.f32 %v684, %v769
    %v786 = vmax.f32 %v685, %v770
    %v787 = vmax.f32 %v686, %v771
    %v788 = vmax.f32 %v687, %v772
    %v789 = vmax.f32 %v688, %v773
    %v790 = vmax.f32 %v689, %v774
    %v791 = vmax.f32 %v690, %v775
    %v792 = vmax.f32 %v691, %v776
    %s793 = sadd.s32 %s357, 4
    %p794 = scmp.lt.s32.totalorder %s793, 16
    %s795 = scalar_select %p794, 0.0, -inf
    %796 = vset.pattern.permute.xlu0 4
    %797 = vperm.xlu0 %796, %v376
    %v798 = vpop.permute.xlu0 %797
    %799 = vset.pattern.permute.xlu0 4
    %800 = vperm.xlu0 %799, %v377
    %v801 = vpop.permute.xlu0 %800
    %802 = vset.pattern.permute.xlu0 4
    %803 = vperm.xlu0 %802, %v378
    %v804 = vpop.permute.xlu0 %803
    %805 = vset.pattern.permute.xlu0 4
    %806 = vperm.xlu0 %805, %v379
    %v807 = vpop.permute.xlu0 %806
    %808 = vset.pattern.permute.xlu0 4
    %809 = vperm.xlu0 %808, %v380
    %v810 = vpop.permute.xlu0 %809
    %811 = vset.pattern.permute.xlu0 4
    %812 = vperm.xlu0 %811, %v381
    %v813 = vpop.permute.xlu0 %812
    %814 = vset.pattern.permute.xlu0 4
    %815 = vperm.xlu0 %814, %v382
    %v816 = vpop.permute.xlu0 %815
    %817 = vset.pattern.permute.xlu0 4
    %818 = vperm.xlu0 %817, %v383
    %v819 = vpop.permute.xlu0 %818
    %820 = vset.pattern.permute.xlu0 4
    %821 = vperm.xlu0 %820, %v384
    %v822 = vpop.permute.xlu0 %821
    %823 = vset.pattern.permute.xlu0 4
    %824 = vperm.xlu0 %823, %v385
    %v825 = vpop.permute.xlu0 %824
    %826 = vset.pattern.permute.xlu0 4
    %827 = vperm.xlu0 %826, %v386
    %v828 = vpop.permute.xlu0 %827
    %829 = vset.pattern.permute.xlu0 4
    %830 = vperm.xlu0 %829, %v387
    %v831 = vpop.permute.xlu0 %830
    %832 = vset.pattern.permute.xlu0 4
    %833 = vperm.xlu0 %832, %v388
    %v834 = vpop.permute.xlu0 %833
    %835 = vset.pattern.permute.xlu0 4
    %836 = vperm.xlu0 %835, %v389
    %v837 = vpop.permute.xlu0 %836
    %838 = vset.pattern.permute.xlu0 4
    %839 = vperm.xlu0 %838, %v390
    %v840 = vpop.permute.xlu0 %839
    %841 = vset.pattern.permute.xlu0 4
    %842 = vperm.xlu0 %841, %v391
    %v843 = vpop.permute.xlu0 %842
    %vm844 = vcmp.eq.s32.totalorder %v798, 1
    %vm845 = vcmp.eq.s32.totalorder %v801, 1
    %vm846 = vcmp.eq.s32.totalorder %v804, 1
    %vm847 = vcmp.eq.s32.totalorder %v807, 1
    %vm848 = vcmp.eq.s32.totalorder %v810, 1
    %vm849 = vcmp.eq.s32.totalorder %v813, 1
    %vm850 = vcmp.eq.s32.totalorder %v816, 1
    %vm851 = vcmp.eq.s32.totalorder %v819, 1
    %vm852 = vcmp.eq.s32.totalorder %v822, 1
    %vm853 = vcmp.eq.s32.totalorder %v825, 1
    %vm854 = vcmp.eq.s32.totalorder %v828, 1
    %vm855 = vcmp.eq.s32.totalorder %v831, 1
    %vm856 = vcmp.eq.s32.totalorder %v834, 1
    %vm857 = vcmp.eq.s32.totalorder %v837, 1
    %vm858 = vcmp.eq.s32.totalorder %v840, 1
    %vm859 = vcmp.eq.s32.totalorder %v843, 1
    %v860 = vperm.slane %v262, 4
    %v861 = vstv %s795
    %v862 = vsel %vm844, %v860, %v861
    %v863 = vsel %vm845, %v860, %v861
    %v864 = vsel %vm846, %v860, %v861
    %v865 = vsel %vm847, %v860, %v861
    %v866 = vsel %vm848, %v860, %v861
    %v867 = vsel %vm849, %v860, %v861
    %v868 = vsel %vm850, %v860, %v861
    %v869 = vsel %vm851, %v860, %v861
    %v870 = vsel %vm852, %v860, %v861
    %v871 = vsel %vm853, %v860, %v861
    %v872 = vsel %vm854, %v860, %v861
    %v873 = vsel %vm855, %v860, %v861
    %v874 = vsel %vm856, %v860, %v861
    %v875 = vsel %vm857, %v860, %v861
    %v876 = vsel %vm858, %v860, %v861
    %v877 = vsel %vm859, %v860, %v861
    %v878 = vmax.f32 %v777, %v862
    %v879 = vmax.f32 %v778, %v863
    %v880 = vmax.f32 %v779, %v864
    %v881 = vmax.f32 %v780, %v865
    %v882 = vmax.f32 %v781, %v866
    %v883 = vmax.f32 %v782, %v867
    %v884 = vmax.f32 %v783, %v868
    %v885 = vmax.f32 %v784, %v869
    %v886 = vmax.f32 %v785, %v870
    %v887 = vmax.f32 %v786, %v871
    %v888 = vmax.f32 %v787, %v872
    %v889 = vmax.f32 %v788, %v873
    %v890 = vmax.f32 %v789, %v874
    %v891 = vmax.f32 %v790, %v875
    %v892 = vmax.f32 %v791, %v876
    %v893 = vmax.f32 %v792, %v877
    %s894 = sadd.s32 %s357, 5
    %p895 = scmp.lt.s32.totalorder %s894, 16
    %s896 = scalar_select %p895, 0.0, -inf
    %897 = vset.pattern.permute.xlu0 5
    %898 = vperm.xlu0 %897, %v376
    %v899 = vpop.permute.xlu0 %898
    %900 = vset.pattern.permute.xlu0 5
    %901 = vperm.xlu0 %900, %v377
    %v902 = vpop.permute.xlu0 %901
    %903 = vset.pattern.permute.xlu0 5
    %904 = vperm.xlu0 %903, %v378
    %v905 = vpop.permute.xlu0 %904
    %906 = vset.pattern.permute.xlu0 5
    %907 = vperm.xlu0 %906, %v379
    %v908 = vpop.permute.xlu0 %907
    %909 = vset.pattern.permute.xlu0 5
    %910 = vperm.xlu0 %909, %v380
    %v911 = vpop.permute.xlu0 %910
    %912 = vset.pattern.permute.xlu0 5
    %913 = vperm.xlu0 %912, %v381
    %v914 = vpop.permute.xlu0 %913
    %915 = vset.pattern.permute.xlu0 5
    %916 = vperm.xlu0 %915, %v382
    %v917 = vpop.permute.xlu0 %916
    %918 = vset.pattern.permute.xlu0 5
    %919 = vperm.xlu0 %918, %v383
    %v920 = vpop.permute.xlu0 %919
    %921 = vset.pattern.permute.xlu0 5
    %922 = vperm.xlu0 %921, %v384
    %v923 = vpop.permute.xlu0 %922
    %924 = vset.pattern.permute.xlu0 5
    %925 = vperm.xlu0 %924, %v385
    %v926 = vpop.permute.xlu0 %925
    %927 = vset.pattern.permute.xlu0 5
    %928 = vperm.xlu0 %927, %v386
    %v929 = vpop.permute.xlu0 %928
    %930 = vset.pattern.permute.xlu0 5
    %931 = vperm.xlu0 %930, %v387
    %v932 = vpop.permute.xlu0 %931
    %933 = vset.pattern.permute.xlu0 5
    %934 = vperm.xlu0 %933, %v388
    %v935 = vpop.permute.xlu0 %934
    %936 = vset.pattern.permute.xlu0 5
    %937 = vperm.xlu0 %936, %v389
    %v938 = vpop.permute.xlu0 %937
    %939 = vset.pattern.permute.xlu0 5
    %940 = vperm.xlu0 %939, %v390
    %v941 = vpop.permute.xlu0 %940
    %942 = vset.pattern.permute.xlu0 5
    %943 = vperm.xlu0 %942, %v391
    %v944 = vpop.permute.xlu0 %943
    %vm945 = vcmp.eq.s32.totalorder %v899, 1
    %vm946 = vcmp.eq.s32.totalorder %v902, 1
    %vm947 = vcmp.eq.s32.totalorder %v905, 1
    %vm948 = vcmp.eq.s32.totalorder %v908, 1
    %vm949 = vcmp.eq.s32.totalorder %v911, 1
    %vm950 = vcmp.eq.s32.totalorder %v914, 1
    %vm951 = vcmp.eq.s32.totalorder %v917, 1
    %vm952 = vcmp.eq.s32.totalorder %v920, 1
    %vm953 = vcmp.eq.s32.totalorder %v923, 1
    %vm954 = vcmp.eq.s32.totalorder %v926, 1
    %vm955 = vcmp.eq.s32.totalorder %v929, 1
    %vm956 = vcmp.eq.s32.totalorder %v932, 1
    %vm957 = vcmp.eq.s32.totalorder %v935, 1
    %vm958 = vcmp.eq.s32.totalorder %v938, 1
    %vm959 = vcmp.eq.s32.totalorder %v941, 1
    %vm960 = vcmp.eq.s32.totalorder %v944, 1
    %v961 = vperm.slane %v262, 5
    %v962 = vstv %s896
    %v963 = vsel %vm945, %v961, %v962
    %v964 = vsel %vm946, %v961, %v962
    %v965 = vsel %vm947, %v961, %v962
    %v966 = vsel %vm948, %v961, %v962
    %v967 = vsel %vm949, %v961, %v962
    %v968 = vsel %vm950, %v961, %v962
    %v969 = vsel %vm951, %v961, %v962
    %v970 = vsel %vm952, %v961, %v962
    %v971 = vsel %vm953, %v961, %v962
    %v972 = vsel %vm954, %v961, %v962
    %v973 = vsel %vm955, %v961, %v962
    %v974 = vsel %vm956, %v961, %v962
    %v975 = vsel %vm957, %v961, %v962
    %v976 = vsel %vm958, %v961, %v962
    %v977 = vsel %vm959, %v961, %v962
    %v978 = vsel %vm960, %v961, %v962
    %v979 = vmax.f32 %v878, %v963
    %v980 = vmax.f32 %v879, %v964
    %v981 = vmax.f32 %v880, %v965
    %v982 = vmax.f32 %v881, %v966
    %v983 = vmax.f32 %v882, %v967
    %v984 = vmax.f32 %v883, %v968
    %v985 = vmax.f32 %v884, %v969
    %v986 = vmax.f32 %v885, %v970
    %v987 = vmax.f32 %v886, %v971
    %v988 = vmax.f32 %v887, %v972
    %v989 = vmax.f32 %v888, %v973
    %v990 = vmax.f32 %v889, %v974
    %v991 = vmax.f32 %v890, %v975
    %v992 = vmax.f32 %v891, %v976
    %v993 = vmax.f32 %v892, %v977
    %v994 = vmax.f32 %v893, %v978
    %s995 = sadd.s32 %s357, 6
    %p996 = scmp.lt.s32.totalorder %s995, 16
    %s997 = scalar_select %p996, 0.0, -inf
    %998 = vset.pattern.permute.xlu0 6
    %999 = vperm.xlu0 %998, %v376
    %v1000 = vpop.permute.xlu0 %999
    %1001 = vset.pattern.permute.xlu0 6
    %1002 = vperm.xlu0 %1001, %v377
    %v1003 = vpop.permute.xlu0 %1002
    %1004 = vset.pattern.permute.xlu0 6
    %1005 = vperm.xlu0 %1004, %v378
    %v1006 = vpop.permute.xlu0 %1005
    %1007 = vset.pattern.permute.xlu0 6
    %1008 = vperm.xlu0 %1007, %v379
    %v1009 = vpop.permute.xlu0 %1008
    %1010 = vset.pattern.permute.xlu0 6
    %1011 = vperm.xlu0 %1010, %v380
    %v1012 = vpop.permute.xlu0 %1011
    %1013 = vset.pattern.permute.xlu0 6
    %1014 = vperm.xlu0 %1013, %v381
    %v1015 = vpop.permute.xlu0 %1014
    %1016 = vset.pattern.permute.xlu0 6
    %1017 = vperm.xlu0 %1016, %v382
    %v1018 = vpop.permute.xlu0 %1017
    %1019 = vset.pattern.permute.xlu0 6
    %1020 = vperm.xlu0 %1019, %v383
    %v1021 = vpop.permute.xlu0 %1020
    %1022 = vset.pattern.permute.xlu0 6
    %1023 = vperm.xlu0 %1022, %v384
    %v1024 = vpop.permute.xlu0 %1023
    %1025 = vset.pattern.permute.xlu0 6
    %1026 = vperm.xlu0 %1025, %v385
    %v1027 = vpop.permute.xlu0 %1026
    %1028 = vset.pattern.permute.xlu0 6
    %1029 = vperm.xlu0 %1028, %v386
    %v1030 = vpop.permute.xlu0 %1029
    %1031 = vset.pattern.permute.xlu0 6
    %1032 = vperm.xlu0 %1031, %v387
    %v1033 = vpop.permute.xlu0 %1032
    %1034 = vset.pattern.permute.xlu0 6
    %1035 = vperm.xlu0 %1034, %v388
    %v1036 = vpop.permute.xlu0 %1035
    %1037 = vset.pattern.permute.xlu0 6
    %1038 = vperm.xlu0 %1037, %v389
    %v1039 = vpop.permute.xlu0 %1038
    %1040 = vset.pattern.permute.xlu0 6
    %1041 = vperm.xlu0 %1040, %v390
    %v1042 = vpop.permute.xlu0 %1041
    %1043 = vset.pattern.permute.xlu0 6
    %1044 = vperm.xlu0 %1043, %v391
    %v1045 = vpop.permute.xlu0 %1044
    %vm1046 = vcmp.eq.s32.totalorder %v1000, 1
    %vm1047 = vcmp.eq.s32.totalorder %v1003, 1
    %vm1048 = vcmp.eq.s32.totalorder %v1006, 1
    %vm1049 = vcmp.eq.s32.totalorder %v1009, 1
    %vm1050 = vcmp.eq.s32.totalorder %v1012, 1
    %vm1051 = vcmp.eq.s32.totalorder %v1015, 1
    %vm1052 = vcmp.eq.s32.totalorder %v1018, 1
    %vm1053 = vcmp.eq.s32.totalorder %v1021, 1
    %vm1054 = vcmp.eq.s32.totalorder %v1024, 1
    %vm1055 = vcmp.eq.s32.totalorder %v1027, 1
    %vm1056 = vcmp.eq.s32.totalorder %v1030, 1
    %vm1057 = vcmp.eq.s32.totalorder %v1033, 1
    %vm1058 = vcmp.eq.s32.totalorder %v1036, 1
    %vm1059 = vcmp.eq.s32.totalorder %v1039, 1
    %vm1060 = vcmp.eq.s32.totalorder %v1042, 1
    %vm1061 = vcmp.eq.s32.totalorder %v1045, 1
    %v1062 = vperm.slane %v262, 6
    %v1063 = vstv %s997
    %v1064 = vsel %vm1046, %v1062, %v1063
    %v1065 = vsel %vm1047, %v1062, %v1063
    %v1066 = vsel %vm1048, %v1062, %v1063
    %v1067 = vsel %vm1049, %v1062, %v1063
    %v1068 = vsel %vm1050, %v1062, %v1063
    %v1069 = vsel %vm1051, %v1062, %v1063
    %v1070 = vsel %vm1052, %v1062, %v1063
    %v1071 = vsel %vm1053, %v1062, %v1063
    %v1072 = vsel %vm1054, %v1062, %v1063
    %v1073 = vsel %vm1055, %v1062, %v1063
    %v1074 = vsel %vm1056, %v1062, %v1063
    %v1075 = vsel %vm1057, %v1062, %v1063
    %v1076 = vsel %vm1058, %v1062, %v1063
    %v1077 = vsel %vm1059, %v1062, %v1063
    %v1078 = vsel %vm1060, %v1062, %v1063
    %v1079 = vsel %vm1061, %v1062, %v1063
    %v1080 = vmax.f32 %v979, %v1064
    %v1081 = vmax.f32 %v980, %v1065
    %v1082 = vmax.f32 %v981, %v1066
    %v1083 = vmax.f32 %v982, %v1067
    %v1084 = vmax.f32 %v983, %v1068
    %v1085 = vmax.f32 %v984, %v1069
    %v1086 = vmax.f32 %v985, %v1070
    %v1087 = vmax.f32 %v986, %v1071
    %v1088 = vmax.f32 %v987, %v1072
    %v1089 = vmax.f32 %v988, %v1073
    %v1090 = vmax.f32 %v989, %v1074
    %v1091 = vmax.f32 %v990, %v1075
    %v1092 = vmax.f32 %v991, %v1076
    %v1093 = vmax.f32 %v992, %v1077
    %v1094 = vmax.f32 %v993, %v1078
    %v1095 = vmax.f32 %v994, %v1079
    %s1096 = sadd.s32 %s357, 7
    %p1097 = scmp.lt.s32.totalorder %s1096, 16
    %s1098 = scalar_select %p1097, 0.0, -inf
    %1099 = vset.pattern.permute.xlu0 7
    %1100 = vperm.xlu0 %1099, %v376
    %v1101 = vpop.permute.xlu0 %1100
    %1102 = vset.pattern.permute.xlu0 7
    %1103 = vperm.xlu0 %1102, %v377
    %v1104 = vpop.permute.xlu0 %1103
    %1105 = vset.pattern.permute.xlu0 7
    %1106 = vperm.xlu0 %1105, %v378
    %v1107 = vpop.permute.xlu0 %1106
    %1108 = vset.pattern.permute.xlu0 7
    %1109 = vperm.xlu0 %1108, %v379
    %v1110 = vpop.permute.xlu0 %1109
    %1111 = vset.pattern.permute.xlu0 7
    %1112 = vperm.xlu0 %1111, %v380
    %v1113 = vpop.permute.xlu0 %1112
    %1114 = vset.pattern.permute.xlu0 7
    %1115 = vperm.xlu0 %1114, %v381
    %v1116 = vpop.permute.xlu0 %1115
    %1117 = vset.pattern.permute.xlu0 7
    %1118 = vperm.xlu0 %1117, %v382
    %v1119 = vpop.permute.xlu0 %1118
    %1120 = vset.pattern.permute.xlu0 7
    %1121 = vperm.xlu0 %1120, %v383
    %v1122 = vpop.permute.xlu0 %1121
    %1123 = vset.pattern.permute.xlu0 7
    %1124 = vperm.xlu0 %1123, %v384
    %v1125 = vpop.permute.xlu0 %1124
    %1126 = vset.pattern.permute.xlu0 7
    %1127 = vperm.xlu0 %1126, %v385
    %v1128 = vpop.permute.xlu0 %1127
    %1129 = vset.pattern.permute.xlu0 7
    %1130 = vperm.xlu0 %1129, %v386
    %v1131 = vpop.permute.xlu0 %1130
    %1132 = vset.pattern.permute.xlu0 7
    %1133 = vperm.xlu0 %1132, %v387
    %v1134 = vpop.permute.xlu0 %1133
    %1135 = vset.pattern.permute.xlu0 7
    %1136 = vperm.xlu0 %1135, %v388
    %v1137 = vpop.permute.xlu0 %1136
    %1138 = vset.pattern.permute.xlu0 7
    %1139 = vperm.xlu0 %1138, %v389
    %v1140 = vpop.permute.xlu0 %1139
    %1141 = vset.pattern.permute.xlu0 7
    %1142 = vperm.xlu0 %1141, %v390
    %v1143 = vpop.permute.xlu0 %1142
    %1144 = vset.pattern.permute.xlu0 7
    %1145 = vperm.xlu0 %1144, %v391
    %v1146 = vpop.permute.xlu0 %1145
    %vm1147 = vcmp.eq.s32.totalorder %v1101, 1
    %vm1148 = vcmp.eq.s32.totalorder %v1104, 1
    %vm1149 = vcmp.eq.s32.totalorder %v1107, 1
    %vm1150 = vcmp.eq.s32.totalorder %v1110, 1
    %vm1151 = vcmp.eq.s32.totalorder %v1113, 1
    %vm1152 = vcmp.eq.s32.totalorder %v1116, 1
    %vm1153 = vcmp.eq.s32.totalorder %v1119, 1
    %vm1154 = vcmp.eq.s32.totalorder %v1122, 1
    %vm1155 = vcmp.eq.s32.totalorder %v1125, 1
    %vm1156 = vcmp.eq.s32.totalorder %v1128, 1
    %vm1157 = vcmp.eq.s32.totalorder %v1131, 1
    %vm1158 = vcmp.eq.s32.totalorder %v1134, 1
    %vm1159 = vcmp.eq.s32.totalorder %v1137, 1
    %vm1160 = vcmp.eq.s32.totalorder %v1140, 1
    %vm1161 = vcmp.eq.s32.totalorder %v1143, 1
    %vm1162 = vcmp.eq.s32.totalorder %v1146, 1
    %v1163 = vperm.slane %v262, 7
    %v1164 = vstv %s1098
    %v1165 = vsel %vm1147, %v1163, %v1164
    %v1166 = vsel %vm1148, %v1163, %v1164
    %v1167 = vsel %vm1149, %v1163, %v1164
    %v1168 = vsel %vm1150, %v1163, %v1164
    %v1169 = vsel %vm1151, %v1163, %v1164
    %v1170 = vsel %vm1152, %v1163, %v1164
    %v1171 = vsel %vm1153, %v1163, %v1164
    %v1172 = vsel %vm1154, %v1163, %v1164
    %v1173 = vsel %vm1155, %v1163, %v1164
    %v1174 = vsel %vm1156, %v1163, %v1164
    %v1175 = vsel %vm1157, %v1163, %v1164
    %v1176 = vsel %vm1158, %v1163, %v1164
    %v1177 = vsel %vm1159, %v1163, %v1164
    %v1178 = vsel %vm1160, %v1163, %v1164
    %v1179 = vsel %vm1161, %v1163, %v1164
    %v1180 = vsel %vm1162, %v1163, %v1164
    %v1181 = vmax.f32 %v1080, %v1165
    %v1182 = vmax.f32 %v1081, %v1166
    %v1183 = vmax.f32 %v1082, %v1167
    %v1184 = vmax.f32 %v1083, %v1168
    %v1185 = vmax.f32 %v1084, %v1169
    %v1186 = vmax.f32 %v1085, %v1170
    %v1187 = vmax.f32 %v1086, %v1171
    %v1188 = vmax.f32 %v1087, %v1172
    %v1189 = vmax.f32 %v1088, %v1173
    %v1190 = vmax.f32 %v1089, %v1174
    %v1191 = vmax.f32 %v1090, %v1175
    %v1192 = vmax.f32 %v1091, %v1176
    %v1193 = vmax.f32 %v1092, %v1177
    %v1194 = vmax.f32 %v1093, %v1178
    %v1195 = vmax.f32 %v1094, %v1179
    %v1196 = vmax.f32 %v1095, %v1180
    %s1197 = scalar_lea.vmem [#allocation4], 4
    %v1198 = vld [vmem:[%s1197] sm:$0xf]
    %s1199 = scalar_lea.vmem [#allocation7], 4
    %v1200 = vld [vmem:[%s1199] sm:$0xf]
    %v1201 = vunpack.c.l.bf16 %v1200
    %1202 = vxpose.xlu0.c.b16.start [1/8] %v1198, 128
    %1203 = vxpose.xlu0.c.b16.cont [2/8] 0, 128
    %1204 = vxpose.xlu0.c.b16.cont [3/8] 0, 128
    %1205 = vxpose.xlu0.c.b16.cont [4/8] 0, 128
    %1206 = vxpose.xlu0.c.b16.cont [5/8] 0, 128
    %1207 = vxpose.xlu0.c.b16.cont [6/8] 0, 128
    %1208 = vxpose.xlu0.c.b16.cont [7/8] 0, 128
    %1209 = vxpose.xlu0.c.b16.end [8/8] 0, 128
    %v1210 = vpop.trf.xlu0
    %v1211 = vpop.trf.xlu0
    %v1212 = vpop.trf.xlu0
    %v1213 = vpop.trf.xlu0
    %v1214 = vpop.trf.xlu0
    %v1215 = vpop.trf.xlu0
    %v1216 = vpop.trf.xlu0
    %v1217 = vpop.trf.xlu0
    %v1219 = vsel %vm279, %v1210, 0
    %v1222 = vsel %vm279, %v1211, 0
    %v1225 = vsel %vm279, %v1212, 0
    %v1228 = vsel %vm279, %v1213, 0
    %v1231 = vsel %vm279, %v1214, 0
    %v1234 = vsel %vm279, %v1215, 0
    %v1237 = vsel %vm279, %v1216, 0
    %v1240 = vsel %vm279, %v1217, 0
    %1242 = vmatpush.bf16.msra.mxu0 0
    %1243 = vmatpush.bf16.msra.mxu0 0
    %1244 = vmatpush.bf16.msra.mxu0 0
    %1245 = vmatpush.bf16.msra.mxu0 0
    %1246 = vmatpush.bf16.msra.mxu0 0
    %1247 = vmatpush.bf16.msra.mxu0 0
    %1248 = vmatpush.bf16.msra.mxu0 0
    %1249 = vmatpush.bf16.msra.mxu0 %v306
    %1250 = vmatmul.bf16.gmra.mxu0 %v1219
    %v1251 = vpop.f32.mrf.mxu0
    %v1252 = vadd.f32 0.0, %v1251
    %v1253 = vpop.f32.mrf.mxu0
    %v1254 = vadd.f32 0.0, %v1253
    %1255 = vmatmul.bf16.gmra.mxu0 %v1222
    %v1256 = vpop.f32.mrf.mxu0
    %v1257 = vadd.f32 0.0, %v1256
    %v1258 = vpop.f32.mrf.mxu0
    %v1259 = vadd.f32 0.0, %v1258
    %1260 = vmatmul.bf16.gmra.mxu0 %v1225
    %v1261 = vpop.f32.mrf.mxu0
    %v1262 = vadd.f32 0.0, %v1261
    %v1263 = vpop.f32.mrf.mxu0
    %v1264 = vadd.f32 0.0, %v1263
    %1265 = vmatmul.bf16.gmra.mxu0 %v1228
    %v1266 = vpop.f32.mrf.mxu0
    %v1267 = vadd.f32 0.0, %v1266
    %v1268 = vpop.f32.mrf.mxu0
    %v1269 = vadd.f32 0.0, %v1268
    %1270 = vmatmul.bf16.gmra.mxu0 %v1231
    %v1271 = vpop.f32.mrf.mxu0
    %v1272 = vadd.f32 0.0, %v1271
    %v1273 = vpop.f32.mrf.mxu0
    %v1274 = vadd.f32 0.0, %v1273
    %1275 = vmatmul.bf16.gmra.mxu0 %v1234
    %v1276 = vpop.f32.mrf.mxu0
    %v1277 = vadd.f32 0.0, %v1276
    %v1278 = vpop.f32.mrf.mxu0
    %v1279 = vadd.f32 0.0, %v1278
    %1280 = vmatmul.bf16.gmra.mxu0 %v1237
    %v1281 = vpop.f32.mrf.mxu0
    %v1282 = vadd.f32 0.0, %v1281
    %v1283 = vpop.f32.mrf.mxu0
    %v1284 = vadd.f32 0.0, %v1283
    %1285 = vmatmul.bf16.gmra.mxu0 %v1240
    %v1286 = vpop.f32.mrf.mxu0
    %v1287 = vadd.f32 0.0, %v1286
    %v1288 = vpop.f32.mrf.mxu0
    %v1289 = vadd.f32 0.0, %v1288
    %1290 = vdwg.mxu0
    %s1291 = sadd.s32 %s243, 8
    %p1292 = scmp.lt.s32.totalorder %s1291, 16
    %s1293 = scalar_select %p1292, 0.0, -inf
    %vm1294 = vcmp.ne.f32.partialorder %v1252, 0.0
    %vm1295 = vcmp.ne.f32.partialorder %v1254, 0.0
    %vm1296 = vcmp.ne.f32.partialorder %v1257, 0.0
    %vm1297 = vcmp.ne.f32.partialorder %v1259, 0.0
    %vm1298 = vcmp.ne.f32.partialorder %v1262, 0.0
    %vm1299 = vcmp.ne.f32.partialorder %v1264, 0.0
    %vm1300 = vcmp.ne.f32.partialorder %v1267, 0.0
    %vm1301 = vcmp.ne.f32.partialorder %v1269, 0.0
    %vm1302 = vcmp.ne.f32.partialorder %v1272, 0.0
    %vm1303 = vcmp.ne.f32.partialorder %v1274, 0.0
    %vm1304 = vcmp.ne.f32.partialorder %v1277, 0.0
    %vm1305 = vcmp.ne.f32.partialorder %v1279, 0.0
    %vm1306 = vcmp.ne.f32.partialorder %v1282, 0.0
    %vm1307 = vcmp.ne.f32.partialorder %v1284, 0.0
    %vm1308 = vcmp.ne.f32.partialorder %v1287, 0.0
    %vm1309 = vcmp.ne.f32.partialorder %v1289, 0.0
    %v1310 = vsel %vm1294, 1, 0
    %v1311 = vsel %vm1295, 1, 0
    %v1312 = vsel %vm1296, 1, 0
    %v1313 = vsel %vm1297, 1, 0
    %v1314 = vsel %vm1298, 1, 0
    %v1315 = vsel %vm1299, 1, 0
    %v1316 = vsel %vm1300, 1, 0
    %v1317 = vsel %vm1301, 1, 0
    %v1318 = vsel %vm1302, 1, 0
    %v1319 = vsel %vm1303, 1, 0
    %v1320 = vsel %vm1304, 1, 0
    %v1321 = vsel %vm1305, 1, 0
    %v1322 = vsel %vm1306, 1, 0
    %v1323 = vsel %vm1307, 1, 0
    %v1324 = vsel %vm1308, 1, 0
    %v1325 = vsel %vm1309, 1, 0
    %1326 = vset.pattern.permute.xlu0 0
    %1327 = vperm.xlu0 %1326, %v1310
    %v1328 = vpop.permute.xlu0 %1327
    %1329 = vset.pattern.permute.xlu0 0
    %1330 = vperm.xlu0 %1329, %v1311
    %v1331 = vpop.permute.xlu0 %1330
    %1332 = vset.pattern.permute.xlu0 0
    %1333 = vperm.xlu0 %1332, %v1312
    %v1334 = vpop.permute.xlu0 %1333
    %1335 = vset.pattern.permute.xlu0 0
    %1336 = vperm.xlu0 %1335, %v1313
    %v1337 = vpop.permute.xlu0 %1336
    %1338 = vset.pattern.permute.xlu0 0
    %1339 = vperm.xlu0 %1338, %v1314
    %v1340 = vpop.permute.xlu0 %1339
    %1341 = vset.pattern.permute.xlu0 0
    %1342 = vperm.xlu0 %1341, %v1315
    %v1343 = vpop.permute.xlu0 %1342
    %1344 = vset.pattern.permute.xlu0 0
    %1345 = vperm.xlu0 %1344, %v1316
    %v1346 = vpop.permute.xlu0 %1345
    %1347 = vset.pattern.permute.xlu0 0
    %1348 = vperm.xlu0 %1347, %v1317
    %v1349 = vpop.permute.xlu0 %1348
    %1350 = vset.pattern.permute.xlu0 0
    %1351 = vperm.xlu0 %1350, %v1318
    %v1352 = vpop.permute.xlu0 %1351
    %1353 = vset.pattern.permute.xlu0 0
    %1354 = vperm.xlu0 %1353, %v1319
    %v1355 = vpop.permute.xlu0 %1354
    %1356 = vset.pattern.permute.xlu0 0
    %1357 = vperm.xlu0 %1356, %v1320
    %v1358 = vpop.permute.xlu0 %1357
    %1359 = vset.pattern.permute.xlu0 0
    %1360 = vperm.xlu0 %1359, %v1321
    %v1361 = vpop.permute.xlu0 %1360
    %1362 = vset.pattern.permute.xlu0 0
    %1363 = vperm.xlu0 %1362, %v1322
    %v1364 = vpop.permute.xlu0 %1363
    %1365 = vset.pattern.permute.xlu0 0
    %1366 = vperm.xlu0 %1365, %v1323
    %v1367 = vpop.permute.xlu0 %1366
    %1368 = vset.pattern.permute.xlu0 0
    %1369 = vperm.xlu0 %1368, %v1324
    %v1370 = vpop.permute.xlu0 %1369
    %1371 = vset.pattern.permute.xlu0 0
    %1372 = vperm.xlu0 %1371, %v1325
    %v1373 = vpop.permute.xlu0 %1372
    %vm1374 = vcmp.eq.s32.totalorder %v1328, 1
    %vm1375 = vcmp.eq.s32.totalorder %v1331, 1
    %vm1376 = vcmp.eq.s32.totalorder %v1334, 1
    %vm1377 = vcmp.eq.s32.totalorder %v1337, 1
    %vm1378 = vcmp.eq.s32.totalorder %v1340, 1
    %vm1379 = vcmp.eq.s32.totalorder %v1343, 1
    %vm1380 = vcmp.eq.s32.totalorder %v1346, 1
    %vm1381 = vcmp.eq.s32.totalorder %v1349, 1
    %vm1382 = vcmp.eq.s32.totalorder %v1352, 1
    %vm1383 = vcmp.eq.s32.totalorder %v1355, 1
    %vm1384 = vcmp.eq.s32.totalorder %v1358, 1
    %vm1385 = vcmp.eq.s32.totalorder %v1361, 1
    %vm1386 = vcmp.eq.s32.totalorder %v1364, 1
    %vm1387 = vcmp.eq.s32.totalorder %v1367, 1
    %vm1388 = vcmp.eq.s32.totalorder %v1370, 1
    %vm1389 = vcmp.eq.s32.totalorder %v1373, 1
    %v1390 = vperm.slane %v1201, 0
    %v1391 = vstv %s1293
    %v1392 = vsel %vm1374, %v1390, %v1391
    %v1393 = vsel %vm1375, %v1390, %v1391
    %v1394 = vsel %vm1376, %v1390, %v1391
    %v1395 = vsel %vm1377, %v1390, %v1391
    %v1396 = vsel %vm1378, %v1390, %v1391
    %v1397 = vsel %vm1379, %v1390, %v1391
    %v1398 = vsel %vm1380, %v1390, %v1391
    %v1399 = vsel %vm1381, %v1390, %v1391
    %v1400 = vsel %vm1382, %v1390, %v1391
    %v1401 = vsel %vm1383, %v1390, %v1391
    %v1402 = vsel %vm1384, %v1390, %v1391
    %v1403 = vsel %vm1385, %v1390, %v1391
    %v1404 = vsel %vm1386, %v1390, %v1391
    %v1405 = vsel %vm1387, %v1390, %v1391
    %v1406 = vsel %vm1388, %v1390, %v1391
    %v1407 = vsel %vm1389, %v1390, %v1391
    %v1408 = vmax.f32 %v1181, %v1392
    %v1409 = vmax.f32 %v1182, %v1393
    %v1410 = vmax.f32 %v1183, %v1394
    %v1411 = vmax.f32 %v1184, %v1395
    %v1412 = vmax.f32 %v1185, %v1396
    %v1413 = vmax.f32 %v1186, %v1397
    %v1414 = vmax.f32 %v1187, %v1398
    %v1415 = vmax.f32 %v1188, %v1399
    %v1416 = vmax.f32 %v1189, %v1400
    %v1417 = vmax.f32 %v1190, %v1401
    %v1418 = vmax.f32 %v1191, %v1402
    %v1419 = vmax.f32 %v1192, %v1403
    %v1420 = vmax.f32 %v1193, %v1404
    %v1421 = vmax.f32 %v1194, %v1405
    %v1422 = vmax.f32 %v1195, %v1406
    %v1423 = vmax.f32 %v1196, %v1407
    %s1424 = sadd.s32 %s1291, 1
    %p1425 = scmp.lt.s32.totalorder %s1424, 16
    %s1426 = scalar_select %p1425, 0.0, -inf
    %1427 = vset.pattern.permute.xlu0 1
    %1428 = vperm.xlu0 %1427, %v1310
    %v1429 = vpop.permute.xlu0 %1428
    %1430 = vset.pattern.permute.xlu0 1
    %1431 = vperm.xlu0 %1430, %v1311
    %v1432 = vpop.permute.xlu0 %1431
    %1433 = vset.pattern.permute.xlu0 1
    %1434 = vperm.xlu0 %1433, %v1312
    %v1435 = vpop.permute.xlu0 %1434
    %1436 = vset.pattern.permute.xlu0 1
    %1437 = vperm.xlu0 %1436, %v1313
    %v1438 = vpop.permute.xlu0 %1437
    %1439 = vset.pattern.permute.xlu0 1
    %1440 = vperm.xlu0 %1439, %v1314
    %v1441 = vpop.permute.xlu0 %1440
    %1442 = vset.pattern.permute.xlu0 1
    %1443 = vperm.xlu0 %1442, %v1315
    %v1444 = vpop.permute.xlu0 %1443
    %1445 = vset.pattern.permute.xlu0 1
    %1446 = vperm.xlu0 %1445, %v1316
    %v1447 = vpop.permute.xlu0 %1446
    %1448 = vset.pattern.permute.xlu0 1
    %1449 = vperm.xlu0 %1448, %v1317
    %v1450 = vpop.permute.xlu0 %1449
    %1451 = vset.pattern.permute.xlu0 1
    %1452 = vperm.xlu0 %1451, %v1318
    %v1453 = vpop.permute.xlu0 %1452
    %1454 = vset.pattern.permute.xlu0 1
    %1455 = vperm.xlu0 %1454, %v1319
    %v1456 = vpop.permute.xlu0 %1455
    %1457 = vset.pattern.permute.xlu0 1
    %1458 = vperm.xlu0 %1457, %v1320
    %v1459 = vpop.permute.xlu0 %1458
    %1460 = vset.pattern.permute.xlu0 1
    %1461 = vperm.xlu0 %1460, %v1321
    %v1462 = vpop.permute.xlu0 %1461
    %1463 = vset.pattern.permute.xlu0 1
    %1464 = vperm.xlu0 %1463, %v1322
    %v1465 = vpop.permute.xlu0 %1464
    %1466 = vset.pattern.permute.xlu0 1
    %1467 = vperm.xlu0 %1466, %v1323
    %v1468 = vpop.permute.xlu0 %1467
    %1469 = vset.pattern.permute.xlu0 1
    %1470 = vperm.xlu0 %1469, %v1324
    %v1471 = vpop.permute.xlu0 %1470
    %1472 = vset.pattern.permute.xlu0 1
    %1473 = vperm.xlu0 %1472, %v1325
    %v1474 = vpop.permute.xlu0 %1473
    %vm1475 = vcmp.eq.s32.totalorder %v1429, 1
    %vm1476 = vcmp.eq.s32.totalorder %v1432, 1
    %vm1477 = vcmp.eq.s32.totalorder %v1435, 1
    %vm1478 = vcmp.eq.s32.totalorder %v1438, 1
    %vm1479 = vcmp.eq.s32.totalorder %v1441, 1
    %vm1480 = vcmp.eq.s32.totalorder %v1444, 1
    %vm1481 = vcmp.eq.s32.totalorder %v1447, 1
    %vm1482 = vcmp.eq.s32.totalorder %v1450, 1
    %vm1483 = vcmp.eq.s32.totalorder %v1453, 1
    %vm1484 = vcmp.eq.s32.totalorder %v1456, 1
    %vm1485 = vcmp.eq.s32.totalorder %v1459, 1
    %vm1486 = vcmp.eq.s32.totalorder %v1462, 1
    %vm1487 = vcmp.eq.s32.totalorder %v1465, 1
    %vm1488 = vcmp.eq.s32.totalorder %v1468, 1
    %vm1489 = vcmp.eq.s32.totalorder %v1471, 1
    %vm1490 = vcmp.eq.s32.totalorder %v1474, 1
    %v1491 = vperm.slane %v1201, 1
    %v1492 = vstv %s1426
    %v1493 = vsel %vm1475, %v1491, %v1492
    %v1494 = vsel %vm1476, %v1491, %v1492
    %v1495 = vsel %vm1477, %v1491, %v1492
    %v1496 = vsel %vm1478, %v1491, %v1492
    %v1497 = vsel %vm1479, %v1491, %v1492
    %v1498 = vsel %vm1480, %v1491, %v1492
    %v1499 = vsel %vm1481, %v1491, %v1492
    %v1500 = vsel %vm1482, %v1491, %v1492
    %v1501 = vsel %vm1483, %v1491, %v1492
    %v1502 = vsel %vm1484, %v1491, %v1492
    %v1503 = vsel %vm1485, %v1491, %v1492
    %v1504 = vsel %vm1486, %v1491, %v1492
    %v1505 = vsel %vm1487, %v1491, %v1492
    %v1506 = vsel %vm1488, %v1491, %v1492
    %v1507 = vsel %vm1489, %v1491, %v1492
    %v1508 = vsel %vm1490, %v1491, %v1492
    %v1509 = vmax.f32 %v1408, %v1493
    %v1510 = vmax.f32 %v1409, %v1494
    %v1511 = vmax.f32 %v1410, %v1495
    %v1512 = vmax.f32 %v1411, %v1496
    %v1513 = vmax.f32 %v1412, %v1497
    %v1514 = vmax.f32 %v1413, %v1498
    %v1515 = vmax.f32 %v1414, %v1499
    %v1516 = vmax.f32 %v1415, %v1500
    %v1517 = vmax.f32 %v1416, %v1501
    %v1518 = vmax.f32 %v1417, %v1502
    %v1519 = vmax.f32 %v1418, %v1503
    %v1520 = vmax.f32 %v1419, %v1504
    %v1521 = vmax.f32 %v1420, %v1505
    %v1522 = vmax.f32 %v1421, %v1506
    %v1523 = vmax.f32 %v1422, %v1507
    %v1524 = vmax.f32 %v1423, %v1508
    %s1525 = sadd.s32 %s1291, 2
    %p1526 = scmp.lt.s32.totalorder %s1525, 16
    %s1527 = scalar_select %p1526, 0.0, -inf
    %1528 = vset.pattern.permute.xlu0 2
    %1529 = vperm.xlu0 %1528, %v1310
    %v1530 = vpop.permute.xlu0 %1529
    %1531 = vset.pattern.permute.xlu0 2
    %1532 = vperm.xlu0 %1531, %v1311
    %v1533 = vpop.permute.xlu0 %1532
    %1534 = vset.pattern.permute.xlu0 2
    %1535 = vperm.xlu0 %1534, %v1312
    %v1536 = vpop.permute.xlu0 %1535
    %1537 = vset.pattern.permute.xlu0 2
    %1538 = vperm.xlu0 %1537, %v1313
    %v1539 = vpop.permute.xlu0 %1538
    %1540 = vset.pattern.permute.xlu0 2
    %1541 = vperm.xlu0 %1540, %v1314
    %v1542 = vpop.permute.xlu0 %1541
    %1543 = vset.pattern.permute.xlu0 2
    %1544 = vperm.xlu0 %1543, %v1315
    %v1545 = vpop.permute.xlu0 %1544
    %1546 = vset.pattern.permute.xlu0 2
    %1547 = vperm.xlu0 %1546, %v1316
    %v1548 = vpop.permute.xlu0 %1547
    %1549 = vset.pattern.permute.xlu0 2
    %1550 = vperm.xlu0 %1549, %v1317
    %v1551 = vpop.permute.xlu0 %1550
    %1552 = vset.pattern.permute.xlu0 2
    %1553 = vperm.xlu0 %1552, %v1318
    %v1554 = vpop.permute.xlu0 %1553
    %1555 = vset.pattern.permute.xlu0 2
    %1556 = vperm.xlu0 %1555, %v1319
    %v1557 = vpop.permute.xlu0 %1556
    %1558 = vset.pattern.permute.xlu0 2
    %1559 = vperm.xlu0 %1558, %v1320
    %v1560 = vpop.permute.xlu0 %1559
    %1561 = vset.pattern.permute.xlu0 2
    %1562 = vperm.xlu0 %1561, %v1321
    %v1563 = vpop.permute.xlu0 %1562
    %1564 = vset.pattern.permute.xlu0 2
    %1565 = vperm.xlu0 %1564, %v1322
    %v1566 = vpop.permute.xlu0 %1565
    %1567 = vset.pattern.permute.xlu0 2
    %1568 = vperm.xlu0 %1567, %v1323
    %v1569 = vpop.permute.xlu0 %1568
    %1570 = vset.pattern.permute.xlu0 2
    %1571 = vperm.xlu0 %1570, %v1324
    %v1572 = vpop.permute.xlu0 %1571
    %1573 = vset.pattern.permute.xlu0 2
    %1574 = vperm.xlu0 %1573, %v1325
    %v1575 = vpop.permute.xlu0 %1574
    %vm1576 = vcmp.eq.s32.totalorder %v1530, 1
    %vm1577 = vcmp.eq.s32.totalorder %v1533, 1
    %vm1578 = vcmp.eq.s32.totalorder %v1536, 1
    %vm1579 = vcmp.eq.s32.totalorder %v1539, 1
    %vm1580 = vcmp.eq.s32.totalorder %v1542, 1
    %vm1581 = vcmp.eq.s32.totalorder %v1545, 1
    %vm1582 = vcmp.eq.s32.totalorder %v1548, 1
    %vm1583 = vcmp.eq.s32.totalorder %v1551, 1
    %vm1584 = vcmp.eq.s32.totalorder %v1554, 1
    %vm1585 = vcmp.eq.s32.totalorder %v1557, 1
    %vm1586 = vcmp.eq.s32.totalorder %v1560, 1
    %vm1587 = vcmp.eq.s32.totalorder %v1563, 1
    %vm1588 = vcmp.eq.s32.totalorder %v1566, 1
    %vm1589 = vcmp.eq.s32.totalorder %v1569, 1
    %vm1590 = vcmp.eq.s32.totalorder %v1572, 1
    %vm1591 = vcmp.eq.s32.totalorder %v1575, 1
    %v1592 = vperm.slane %v1201, 2
    %v1593 = vstv %s1527
    %v1594 = vsel %vm1576, %v1592, %v1593
    %v1595 = vsel %vm1577, %v1592, %v1593
    %v1596 = vsel %vm1578, %v1592, %v1593
    %v1597 = vsel %vm1579, %v1592, %v1593
    %v1598 = vsel %vm1580, %v1592, %v1593
    %v1599 = vsel %vm1581, %v1592, %v1593
    %v1600 = vsel %vm1582, %v1592, %v1593
    %v1601 = vsel %vm1583, %v1592, %v1593
    %v1602 = vsel %vm1584, %v1592, %v1593
    %v1603 = vsel %vm1585, %v1592, %v1593
    %v1604 = vsel %vm1586, %v1592, %v1593
    %v1605 = vsel %vm1587, %v1592, %v1593
    %v1606 = vsel %vm1588, %v1592, %v1593
    %v1607 = vsel %vm1589, %v1592, %v1593
    %v1608 = vsel %vm1590, %v1592, %v1593
    %v1609 = vsel %vm1591, %v1592, %v1593
    %v1610 = vmax.f32 %v1509, %v1594
    %v1611 = vmax.f32 %v1510, %v1595
    %v1612 = vmax.f32 %v1511, %v1596
    %v1613 = vmax.f32 %v1512, %v1597
    %v1614 = vmax.f32 %v1513, %v1598
    %v1615 = vmax.f32 %v1514, %v1599
    %v1616 = vmax.f32 %v1515, %v1600
    %v1617 = vmax.f32 %v1516, %v1601
    %v1618 = vmax.f32 %v1517, %v1602
    %v1619 = vmax.f32 %v1518, %v1603
    %v1620 = vmax.f32 %v1519, %v1604
    %v1621 = vmax.f32 %v1520, %v1605
    %v1622 = vmax.f32 %v1521, %v1606
    %v1623 = vmax.f32 %v1522, %v1607
    %v1624 = vmax.f32 %v1523, %v1608
    %v1625 = vmax.f32 %v1524, %v1609
    %s1626 = sadd.s32 %s1291, 3
    %p1627 = scmp.lt.s32.totalorder %s1626, 16
    %s1628 = scalar_select %p1627, 0.0, -inf
    %1629 = vset.pattern.permute.xlu0 3
    %1630 = vperm.xlu0 %1629, %v1310
    %v1631 = vpop.permute.xlu0 %1630
    %1632 = vset.pattern.permute.xlu0 3
    %1633 = vperm.xlu0 %1632, %v1311
    %v1634 = vpop.permute.xlu0 %1633
    %1635 = vset.pattern.permute.xlu0 3
    %1636 = vperm.xlu0 %1635, %v1312
    %v1637 = vpop.permute.xlu0 %1636
    %1638 = vset.pattern.permute.xlu0 3
    %1639 = vperm.xlu0 %1638, %v1313
    %v1640 = vpop.permute.xlu0 %1639
    %1641 = vset.pattern.permute.xlu0 3
    %1642 = vperm.xlu0 %1641, %v1314
    %v1643 = vpop.permute.xlu0 %1642
    %1644 = vset.pattern.permute.xlu0 3
    %1645 = vperm.xlu0 %1644, %v1315
    %v1646 = vpop.permute.xlu0 %1645
    %1647 = vset.pattern.permute.xlu0 3
    %1648 = vperm.xlu0 %1647, %v1316
    %v1649 = vpop.permute.xlu0 %1648
    %1650 = vset.pattern.permute.xlu0 3
    %1651 = vperm.xlu0 %1650, %v1317
    %v1652 = vpop.permute.xlu0 %1651
    %1653 = vset.pattern.permute.xlu0 3
    %1654 = vperm.xlu0 %1653, %v1318
    %v1655 = vpop.permute.xlu0 %1654
    %1656 = vset.pattern.permute.xlu0 3
    %1657 = vperm.xlu0 %1656, %v1319
    %v1658 = vpop.permute.xlu0 %1657
    %1659 = vset.pattern.permute.xlu0 3
    %1660 = vperm.xlu0 %1659, %v1320
    %v1661 = vpop.permute.xlu0 %1660
    %1662 = vset.pattern.permute.xlu0 3
    %1663 = vperm.xlu0 %1662, %v1321
    %v1664 = vpop.permute.xlu0 %1663
    %1665 = vset.pattern.permute.xlu0 3
    %1666 = vperm.xlu0 %1665, %v1322
    %v1667 = vpop.permute.xlu0 %1666
    %1668 = vset.pattern.permute.xlu0 3
    %1669 = vperm.xlu0 %1668, %v1323
    %v1670 = vpop.permute.xlu0 %1669
    %1671 = vset.pattern.permute.xlu0 3
    %1672 = vperm.xlu0 %1671, %v1324
    %v1673 = vpop.permute.xlu0 %1672
    %1674 = vset.pattern.permute.xlu0 3
    %1675 = vperm.xlu0 %1674, %v1325
    %v1676 = vpop.permute.xlu0 %1675
    %vm1677 = vcmp.eq.s32.totalorder %v1631, 1
    %vm1678 = vcmp.eq.s32.totalorder %v1634, 1
    %vm1679 = vcmp.eq.s32.totalorder %v1637, 1
    %vm1680 = vcmp.eq.s32.totalorder %v1640, 1
    %vm1681 = vcmp.eq.s32.totalorder %v1643, 1
    %vm1682 = vcmp.eq.s32.totalorder %v1646, 1
    %vm1683 = vcmp.eq.s32.totalorder %v1649, 1
    %vm1684 = vcmp.eq.s32.totalorder %v1652, 1
    %vm1685 = vcmp.eq.s32.totalorder %v1655, 1
    %vm1686 = vcmp.eq.s32.totalorder %v1658, 1
    %vm1687 = vcmp.eq.s32.totalorder %v1661, 1
    %vm1688 = vcmp.eq.s32.totalorder %v1664, 1
    %vm1689 = vcmp.eq.s32.totalorder %v1667, 1
    %vm1690 = vcmp.eq.s32.totalorder %v1670, 1
    %vm1691 = vcmp.eq.s32.totalorder %v1673, 1
    %vm1692 = vcmp.eq.s32.totalorder %v1676, 1
    %v1693 = vperm.slane %v1201, 3
    %v1694 = vstv %s1628
    %v1695 = vsel %vm1677, %v1693, %v1694
    %v1696 = vsel %vm1678, %v1693, %v1694
    %v1697 = vsel %vm1679, %v1693, %v1694
    %v1698 = vsel %vm1680, %v1693, %v1694
    %v1699 = vsel %vm1681, %v1693, %v1694
    %v1700 = vsel %vm1682, %v1693, %v1694
    %v1701 = vsel %vm1683, %v1693, %v1694
    %v1702 = vsel %vm1684, %v1693, %v1694
    %v1703 = vsel %vm1685, %v1693, %v1694
    %v1704 = vsel %vm1686, %v1693, %v1694
    %v1705 = vsel %vm1687, %v1693, %v1694
    %v1706 = vsel %vm1688, %v1693, %v1694
    %v1707 = vsel %vm1689, %v1693, %v1694
    %v1708 = vsel %vm1690, %v1693, %v1694
    %v1709 = vsel %vm1691, %v1693, %v1694
    %v1710 = vsel %vm1692, %v1693, %v1694
    %v1711 = vmax.f32 %v1610, %v1695
    %v1712 = vmax.f32 %v1611, %v1696
    %v1713 = vmax.f32 %v1612, %v1697
    %v1714 = vmax.f32 %v1613, %v1698
    %v1715 = vmax.f32 %v1614, %v1699
    %v1716 = vmax.f32 %v1615, %v1700
    %v1717 = vmax.f32 %v1616, %v1701
    %v1718 = vmax.f32 %v1617, %v1702
    %v1719 = vmax.f32 %v1618, %v1703
    %v1720 = vmax.f32 %v1619, %v1704
    %v1721 = vmax.f32 %v1620, %v1705
    %v1722 = vmax.f32 %v1621, %v1706
    %v1723 = vmax.f32 %v1622, %v1707
    %v1724 = vmax.f32 %v1623, %v1708
    %v1725 = vmax.f32 %v1624, %v1709
    %v1726 = vmax.f32 %v1625, %v1710
    %s1727 = sadd.s32 %s1291, 4
    %p1728 = scmp.lt.s32.totalorder %s1727, 16
    %s1729 = scalar_select %p1728, 0.0, -inf
    %1730 = vset.pattern.permute.xlu0 4
    %1731 = vperm.xlu0 %1730, %v1310
    %v1732 = vpop.permute.xlu0 %1731
    %1733 = vset.pattern.permute.xlu0 4
    %1734 = vperm.xlu0 %1733, %v1311
    %v1735 = vpop.permute.xlu0 %1734
    %1736 = vset.pattern.permute.xlu0 4
    %1737 = vperm.xlu0 %1736, %v1312
    %v1738 = vpop.permute.xlu0 %1737
    %1739 = vset.pattern.permute.xlu0 4
    %1740 = vperm.xlu0 %1739, %v1313
    %v1741 = vpop.permute.xlu0 %1740
    %1742 = vset.pattern.permute.xlu0 4
    %1743 = vperm.xlu0 %1742, %v1314
    %v1744 = vpop.permute.xlu0 %1743
    %1745 = vset.pattern.permute.xlu0 4
    %1746 = vperm.xlu0 %1745, %v1315
    %v1747 = vpop.permute.xlu0 %1746
    %1748 = vset.pattern.permute.xlu0 4
    %1749 = vperm.xlu0 %1748, %v1316
    %v1750 = vpop.permute.xlu0 %1749
    %1751 = vset.pattern.permute.xlu0 4
    %1752 = vperm.xlu0 %1751, %v1317
    %v1753 = vpop.permute.xlu0 %1752
    %1754 = vset.pattern.permute.xlu0 4
    %1755 = vperm.xlu0 %1754, %v1318
    %v1756 = vpop.permute.xlu0 %1755
    %1757 = vset.pattern.permute.xlu0 4
    %1758 = vperm.xlu0 %1757, %v1319
    %v1759 = vpop.permute.xlu0 %1758
    %1760 = vset.pattern.permute.xlu0 4
    %1761 = vperm.xlu0 %1760, %v1320
    %v1762 = vpop.permute.xlu0 %1761
    %1763 = vset.pattern.permute.xlu0 4
    %1764 = vperm.xlu0 %1763, %v1321
    %v1765 = vpop.permute.xlu0 %1764
    %1766 = vset.pattern.permute.xlu0 4
    %1767 = vperm.xlu0 %1766, %v1322
    %v1768 = vpop.permute.xlu0 %1767
    %1769 = vset.pattern.permute.xlu0 4
    %1770 = vperm.xlu0 %1769, %v1323
    %v1771 = vpop.permute.xlu0 %1770
    %1772 = vset.pattern.permute.xlu0 4
    %1773 = vperm.xlu0 %1772, %v1324
    %v1774 = vpop.permute.xlu0 %1773
    %1775 = vset.pattern.permute.xlu0 4
    %1776 = vperm.xlu0 %1775, %v1325
    %v1777 = vpop.permute.xlu0 %1776
    %vm1778 = vcmp.eq.s32.totalorder %v1732, 1
    %vm1779 = vcmp.eq.s32.totalorder %v1735, 1
    %vm1780 = vcmp.eq.s32.totalorder %v1738, 1
    %vm1781 = vcmp.eq.s32.totalorder %v1741, 1
    %vm1782 = vcmp.eq.s32.totalorder %v1744, 1
    %vm1783 = vcmp.eq.s32.totalorder %v1747, 1
    %vm1784 = vcmp.eq.s32.totalorder %v1750, 1
    %vm1785 = vcmp.eq.s32.totalorder %v1753, 1
    %vm1786 = vcmp.eq.s32.totalorder %v1756, 1
    %vm1787 = vcmp.eq.s32.totalorder %v1759, 1
    %vm1788 = vcmp.eq.s32.totalorder %v1762, 1
    %vm1789 = vcmp.eq.s32.totalorder %v1765, 1
    %vm1790 = vcmp.eq.s32.totalorder %v1768, 1
    %vm1791 = vcmp.eq.s32.totalorder %v1771, 1
    %vm1792 = vcmp.eq.s32.totalorder %v1774, 1
    %vm1793 = vcmp.eq.s32.totalorder %v1777, 1
    %v1794 = vperm.slane %v1201, 4
    %v1795 = vstv %s1729
    %v1796 = vsel %vm1778, %v1794, %v1795
    %v1797 = vsel %vm1779, %v1794, %v1795
    %v1798 = vsel %vm1780, %v1794, %v1795
    %v1799 = vsel %vm1781, %v1794, %v1795
    %v1800 = vsel %vm1782, %v1794, %v1795
    %v1801 = vsel %vm1783, %v1794, %v1795
    %v1802 = vsel %vm1784, %v1794, %v1795
    %v1803 = vsel %vm1785, %v1794, %v1795
    %v1804 = vsel %vm1786, %v1794, %v1795
    %v1805 = vsel %vm1787, %v1794, %v1795
    %v1806 = vsel %vm1788, %v1794, %v1795
    %v1807 = vsel %vm1789, %v1794, %v1795
    %v1808 = vsel %vm1790, %v1794, %v1795
    %v1809 = vsel %vm1791, %v1794, %v1795
    %v1810 = vsel %vm1792, %v1794, %v1795
    %v1811 = vsel %vm1793, %v1794, %v1795
    %v1812 = vmax.f32 %v1711, %v1796
    %v1813 = vmax.f32 %v1712, %v1797
    %v1814 = vmax.f32 %v1713, %v1798
    %v1815 = vmax.f32 %v1714, %v1799
    %v1816 = vmax.f32 %v1715, %v1800
    %v1817 = vmax.f32 %v1716, %v1801
    %v1818 = vmax.f32 %v1717, %v1802
    %v1819 = vmax.f32 %v1718, %v1803
    %v1820 = vmax.f32 %v1719, %v1804
    %v1821 = vmax.f32 %v1720, %v1805
    %v1822 = vmax.f32 %v1721, %v1806
    %v1823 = vmax.f32 %v1722, %v1807
    %v1824 = vmax.f32 %v1723, %v1808
    %v1825 = vmax.f32 %v1724, %v1809
    %v1826 = vmax.f32 %v1725, %v1810
    %v1827 = vmax.f32 %v1726, %v1811
    %s1828 = sadd.s32 %s1291, 5
    %p1829 = scmp.lt.s32.totalorder %s1828, 16
    %s1830 = scalar_select %p1829, 0.0, -inf
    %1831 = vset.pattern.permute.xlu0 5
    %1832 = vperm.xlu0 %1831, %v1310
    %v1833 = vpop.permute.xlu0 %1832
    %1834 = vset.pattern.permute.xlu0 5
    %1835 = vperm.xlu0 %1834, %v1311
    %v1836 = vpop.permute.xlu0 %1835
    %1837 = vset.pattern.permute.xlu0 5
    %1838 = vperm.xlu0 %1837, %v1312
    %v1839 = vpop.permute.xlu0 %1838
    %1840 = vset.pattern.permute.xlu0 5
    %1841 = vperm.xlu0 %1840, %v1313
    %v1842 = vpop.permute.xlu0 %1841
    %1843 = vset.pattern.permute.xlu0 5
    %1844 = vperm.xlu0 %1843, %v1314
    %v1845 = vpop.permute.xlu0 %1844
    %1846 = vset.pattern.permute.xlu0 5
    %1847 = vperm.xlu0 %1846, %v1315
    %v1848 = vpop.permute.xlu0 %1847
    %1849 = vset.pattern.permute.xlu0 5
    %1850 = vperm.xlu0 %1849, %v1316
    %v1851 = vpop.permute.xlu0 %1850
    %1852 = vset.pattern.permute.xlu0 5
    %1853 = vperm.xlu0 %1852, %v1317
    %v1854 = vpop.permute.xlu0 %1853
    %1855 = vset.pattern.permute.xlu0 5
    %1856 = vperm.xlu0 %1855, %v1318
    %v1857 = vpop.permute.xlu0 %1856
    %1858 = vset.pattern.permute.xlu0 5
    %1859 = vperm.xlu0 %1858, %v1319
    %v1860 = vpop.permute.xlu0 %1859
    %1861 = vset.pattern.permute.xlu0 5
    %1862 = vperm.xlu0 %1861, %v1320
    %v1863 = vpop.permute.xlu0 %1862
    %1864 = vset.pattern.permute.xlu0 5
    %1865 = vperm.xlu0 %1864, %v1321
    %v1866 = vpop.permute.xlu0 %1865
    %1867 = vset.pattern.permute.xlu0 5
    %1868 = vperm.xlu0 %1867, %v1322
    %v1869 = vpop.permute.xlu0 %1868
    %1870 = vset.pattern.permute.xlu0 5
    %1871 = vperm.xlu0 %1870, %v1323
    %v1872 = vpop.permute.xlu0 %1871
    %1873 = vset.pattern.permute.xlu0 5
    %1874 = vperm.xlu0 %1873, %v1324
    %v1875 = vpop.permute.xlu0 %1874
    %1876 = vset.pattern.permute.xlu0 5
    %1877 = vperm.xlu0 %1876, %v1325
    %v1878 = vpop.permute.xlu0 %1877
    %vm1879 = vcmp.eq.s32.totalorder %v1833, 1
    %vm1880 = vcmp.eq.s32.totalorder %v1836, 1
    %vm1881 = vcmp.eq.s32.totalorder %v1839, 1
    %vm1882 = vcmp.eq.s32.totalorder %v1842, 1
    %vm1883 = vcmp.eq.s32.totalorder %v1845, 1
    %vm1884 = vcmp.eq.s32.totalorder %v1848, 1
    %vm1885 = vcmp.eq.s32.totalorder %v1851, 1
    %vm1886 = vcmp.eq.s32.totalorder %v1854, 1
    %vm1887 = vcmp.eq.s32.totalorder %v1857, 1
    %vm1888 = vcmp.eq.s32.totalorder %v1860, 1
    %vm1889 = vcmp.eq.s32.totalorder %v1863, 1
    %vm1890 = vcmp.eq.s32.totalorder %v1866, 1
    %vm1891 = vcmp.eq.s32.totalorder %v1869, 1
    %vm1892 = vcmp.eq.s32.totalorder %v1872, 1
    %vm1893 = vcmp.eq.s32.totalorder %v1875, 1
    %vm1894 = vcmp.eq.s32.totalorder %v1878, 1
    %v1895 = vperm.slane %v1201, 5
    %v1896 = vstv %s1830
    %v1897 = vsel %vm1879, %v1895, %v1896
    %v1898 = vsel %vm1880, %v1895, %v1896
    %v1899 = vsel %vm1881, %v1895, %v1896
    %v1900 = vsel %vm1882, %v1895, %v1896
    %v1901 = vsel %vm1883, %v1895, %v1896
    %v1902 = vsel %vm1884, %v1895, %v1896
    %v1903 = vsel %vm1885, %v1895, %v1896
    %v1904 = vsel %vm1886, %v1895, %v1896
    %v1905 = vsel %vm1887, %v1895, %v1896
    %v1906 = vsel %vm1888, %v1895, %v1896
    %v1907 = vsel %vm1889, %v1895, %v1896
    %v1908 = vsel %vm1890, %v1895, %v1896
    %v1909 = vsel %vm1891, %v1895, %v1896
    %v1910 = vsel %vm1892, %v1895, %v1896
    %v1911 = vsel %vm1893, %v1895, %v1896
    %v1912 = vsel %vm1894, %v1895, %v1896
    %v1913 = vmax.f32 %v1812, %v1897
    %v1914 = vmax.f32 %v1813, %v1898
    %v1915 = vmax.f32 %v1814, %v1899
    %v1916 = vmax.f32 %v1815, %v1900
    %v1917 = vmax.f32 %v1816, %v1901
    %v1918 = vmax.f32 %v1817, %v1902
    %v1919 = vmax.f32 %v1818, %v1903
    %v1920 = vmax.f32 %v1819, %v1904
    %v1921 = vmax.f32 %v1820, %v1905
    %v1922 = vmax.f32 %v1821, %v1906
    %v1923 = vmax.f32 %v1822, %v1907
    %v1924 = vmax.f32 %v1823, %v1908
    %v1925 = vmax.f32 %v1824, %v1909
    %v1926 = vmax.f32 %v1825, %v1910
    %v1927 = vmax.f32 %v1826, %v1911
    %v1928 = vmax.f32 %v1827, %v1912
    %s1929 = sadd.s32 %s1291, 6
    %p1930 = scmp.lt.s32.totalorder %s1929, 16
    %s1931 = scalar_select %p1930, 0.0, -inf
    %1932 = vset.pattern.permute.xlu0 6
    %1933 = vperm.xlu0 %1932, %v1310
    %v1934 = vpop.permute.xlu0 %1933
    %1935 = vset.pattern.permute.xlu0 6
    %1936 = vperm.xlu0 %1935, %v1311
    %v1937 = vpop.permute.xlu0 %1936
    %1938 = vset.pattern.permute.xlu0 6
    %1939 = vperm.xlu0 %1938, %v1312
    %v1940 = vpop.permute.xlu0 %1939
    %1941 = vset.pattern.permute.xlu0 6
    %1942 = vperm.xlu0 %1941, %v1313
    %v1943 = vpop.permute.xlu0 %1942
    %1944 = vset.pattern.permute.xlu0 6
    %1945 = vperm.xlu0 %1944, %v1314
    %v1946 = vpop.permute.xlu0 %1945
    %1947 = vset.pattern.permute.xlu0 6
    %1948 = vperm.xlu0 %1947, %v1315
    %v1949 = vpop.permute.xlu0 %1948
    %1950 = vset.pattern.permute.xlu0 6
    %1951 = vperm.xlu0 %1950, %v1316
    %v1952 = vpop.permute.xlu0 %1951
    %1953 = vset.pattern.permute.xlu0 6
    %1954 = vperm.xlu0 %1953, %v1317
    %v1955 = vpop.permute.xlu0 %1954
    %1956 = vset.pattern.permute.xlu0 6
    %1957 = vperm.xlu0 %1956, %v1318
    %v1958 = vpop.permute.xlu0 %1957
    %1959 = vset.pattern.permute.xlu0 6
    %1960 = vperm.xlu0 %1959, %v1319
    %v1961 = vpop.permute.xlu0 %1960
    %1962 = vset.pattern.permute.xlu0 6
    %1963 = vperm.xlu0 %1962, %v1320
    %v1964 = vpop.permute.xlu0 %1963
    %1965 = vset.pattern.permute.xlu0 6
    %1966 = vperm.xlu0 %1965, %v1321
    %v1967 = vpop.permute.xlu0 %1966
    %1968 = vset.pattern.permute.xlu0 6
    %1969 = vperm.xlu0 %1968, %v1322
    %v1970 = vpop.permute.xlu0 %1969
    %1971 = vset.pattern.permute.xlu0 6
    %1972 = vperm.xlu0 %1971, %v1323
    %v1973 = vpop.permute.xlu0 %1972
    %1974 = vset.pattern.permute.xlu0 6
    %1975 = vperm.xlu0 %1974, %v1324
    %v1976 = vpop.permute.xlu0 %1975
    %1977 = vset.pattern.permute.xlu0 6
    %1978 = vperm.xlu0 %1977, %v1325
    %v1979 = vpop.permute.xlu0 %1978
    %vm1980 = vcmp.eq.s32.totalorder %v1934, 1
    %vm1981 = vcmp.eq.s32.totalorder %v1937, 1
    %vm1982 = vcmp.eq.s32.totalorder %v1940, 1
    %vm1983 = vcmp.eq.s32.totalorder %v1943, 1
    %vm1984 = vcmp.eq.s32.totalorder %v1946, 1
    %vm1985 = vcmp.eq.s32.totalorder %v1949, 1
    %vm1986 = vcmp.eq.s32.totalorder %v1952, 1
    %vm1987 = vcmp.eq.s32.totalorder %v1955, 1
    %vm1988 = vcmp.eq.s32.totalorder %v1958, 1
    %vm1989 = vcmp.eq.s32.totalorder %v1961, 1
    %vm1990 = vcmp.eq.s32.totalorder %v1964, 1
    %vm1991 = vcmp.eq.s32.totalorder %v1967, 1
    %vm1992 = vcmp.eq.s32.totalorder %v1970, 1
    %vm1993 = vcmp.eq.s32.totalorder %v1973, 1
    %vm1994 = vcmp.eq.s32.totalorder %v1976, 1
    %vm1995 = vcmp.eq.s32.totalorder %v1979, 1
    %v1996 = vperm.slane %v1201, 6
    %v1997 = vstv %s1931
    %v1998 = vsel %vm1980, %v1996, %v1997
    %v1999 = vsel %vm1981, %v1996, %v1997
    %v2000 = vsel %vm1982, %v1996, %v1997
    %v2001 = vsel %vm1983, %v1996, %v1997
    %v2002 = vsel %vm1984, %v1996, %v1997
    %v2003 = vsel %vm1985, %v1996, %v1997
    %v2004 = vsel %vm1986, %v1996, %v1997
    %v2005 = vsel %vm1987, %v1996, %v1997
    %v2006 = vsel %vm1988, %v1996, %v1997
    %v2007 = vsel %vm1989, %v1996, %v1997
    %v2008 = vsel %vm1990, %v1996, %v1997
    %v2009 = vsel %vm1991, %v1996, %v1997
    %v2010 = vsel %vm1992, %v1996, %v1997
    %v2011 = vsel %vm1993, %v1996, %v1997
    %v2012 = vsel %vm1994, %v1996, %v1997
    %v2013 = vsel %vm1995, %v1996, %v1997
    %v2014 = vmax.f32 %v1913, %v1998
    %v2015 = vmax.f32 %v1914, %v1999
    %v2016 = vmax.f32 %v1915, %v2000
    %v2017 = vmax.f32 %v1916, %v2001
    %v2018 = vmax.f32 %v1917, %v2002
    %v2019 = vmax.f32 %v1918, %v2003
    %v2020 = vmax.f32 %v1919, %v2004
    %v2021 = vmax.f32 %v1920, %v2005
    %v2022 = vmax.f32 %v1921, %v2006
    %v2023 = vmax.f32 %v1922, %v2007
    %v2024 = vmax.f32 %v1923, %v2008
    %v2025 = vmax.f32 %v1924, %v2009
    %v2026 = vmax.f32 %v1925, %v2010
    %v2027 = vmax.f32 %v1926, %v2011
    %v2028 = vmax.f32 %v1927, %v2012
    %v2029 = vmax.f32 %v1928, %v2013
    %s2030 = sadd.s32 %s1291, 7
    %p2031 = scmp.lt.s32.totalorder %s2030, 16
    %s2032 = scalar_select %p2031, 0.0, -inf
    %2033 = vset.pattern.permute.xlu0 7
    %2034 = vperm.xlu0 %2033, %v1310
    %v2035 = vpop.permute.xlu0 %2034
    %2036 = vset.pattern.permute.xlu0 7
    %2037 = vperm.xlu0 %2036, %v1311
    %v2038 = vpop.permute.xlu0 %2037
    %2039 = vset.pattern.permute.xlu0 7
    %2040 = vperm.xlu0 %2039, %v1312
    %v2041 = vpop.permute.xlu0 %2040
    %2042 = vset.pattern.permute.xlu0 7
    %2043 = vperm.xlu0 %2042, %v1313
    %v2044 = vpop.permute.xlu0 %2043
    %2045 = vset.pattern.permute.xlu0 7
    %2046 = vperm.xlu0 %2045, %v1314
    %v2047 = vpop.permute.xlu0 %2046
    %2048 = vset.pattern.permute.xlu0 7
    %2049 = vperm.xlu0 %2048, %v1315
    %v2050 = vpop.permute.xlu0 %2049
    %2051 = vset.pattern.permute.xlu0 7
    %2052 = vperm.xlu0 %2051, %v1316
    %v2053 = vpop.permute.xlu0 %2052
    %2054 = vset.pattern.permute.xlu0 7
    %2055 = vperm.xlu0 %2054, %v1317
    %v2056 = vpop.permute.xlu0 %2055
    %2057 = vset.pattern.permute.xlu0 7
    %2058 = vperm.xlu0 %2057, %v1318
    %v2059 = vpop.permute.xlu0 %2058
    %2060 = vset.pattern.permute.xlu0 7
    %2061 = vperm.xlu0 %2060, %v1319
    %v2062 = vpop.permute.xlu0 %2061
    %2063 = vset.pattern.permute.xlu0 7
    %2064 = vperm.xlu0 %2063, %v1320
    %v2065 = vpop.permute.xlu0 %2064
    %2066 = vset.pattern.permute.xlu0 7
    %2067 = vperm.xlu0 %2066, %v1321
    %v2068 = vpop.permute.xlu0 %2067
    %2069 = vset.pattern.permute.xlu0 7
    %2070 = vperm.xlu0 %2069, %v1322
    %v2071 = vpop.permute.xlu0 %2070
    %2072 = vset.pattern.permute.xlu0 7
    %2073 = vperm.xlu0 %2072, %v1323
    %v2074 = vpop.permute.xlu0 %2073
    %2075 = vset.pattern.permute.xlu0 7
    %2076 = vperm.xlu0 %2075, %v1324
    %v2077 = vpop.permute.xlu0 %2076
    %2078 = vset.pattern.permute.xlu0 7
    %2079 = vperm.xlu0 %2078, %v1325
    %v2080 = vpop.permute.xlu0 %2079
    %vm2081 = vcmp.eq.s32.totalorder %v2035, 1
    %vm2082 = vcmp.eq.s32.totalorder %v2038, 1
    %vm2083 = vcmp.eq.s32.totalorder %v2041, 1
    %vm2084 = vcmp.eq.s32.totalorder %v2044, 1
    %vm2085 = vcmp.eq.s32.totalorder %v2047, 1
    %vm2086 = vcmp.eq.s32.totalorder %v2050, 1
    %vm2087 = vcmp.eq.s32.totalorder %v2053, 1
    %vm2088 = vcmp.eq.s32.totalorder %v2056, 1
    %vm2089 = vcmp.eq.s32.totalorder %v2059, 1
    %vm2090 = vcmp.eq.s32.totalorder %v2062, 1
    %vm2091 = vcmp.eq.s32.totalorder %v2065, 1
    %vm2092 = vcmp.eq.s32.totalorder %v2068, 1
    %vm2093 = vcmp.eq.s32.totalorder %v2071, 1
    %vm2094 = vcmp.eq.s32.totalorder %v2074, 1
    %vm2095 = vcmp.eq.s32.totalorder %v2077, 1
    %vm2096 = vcmp.eq.s32.totalorder %v2080, 1
    %v2097 = vperm.slane %v1201, 7
    %v2098 = vstv %s2032
    %v2099 = vsel %vm2081, %v2097, %v2098
    %v2100 = vsel %vm2082, %v2097, %v2098
    %v2101 = vsel %vm2083, %v2097, %v2098
    %v2102 = vsel %vm2084, %v2097, %v2098
    %v2103 = vsel %vm2085, %v2097, %v2098
    %v2104 = vsel %vm2086, %v2097, %v2098
    %v2105 = vsel %vm2087, %v2097, %v2098
    %v2106 = vsel %vm2088, %v2097, %v2098
    %v2107 = vsel %vm2089, %v2097, %v2098
    %v2108 = vsel %vm2090, %v2097, %v2098
    %v2109 = vsel %vm2091, %v2097, %v2098
    %v2110 = vsel %vm2092, %v2097, %v2098
    %v2111 = vsel %vm2093, %v2097, %v2098
    %v2112 = vsel %vm2094, %v2097, %v2098
    %v2113 = vsel %vm2095, %v2097, %v2098
    %v2114 = vsel %vm2096, %v2097, %v2098
    %v2115 = vmax.f32 %v2014, %v2099
    %v2116 = vmax.f32 %v2015, %v2100
    %v2117 = vmax.f32 %v2016, %v2101
    %v2118 = vmax.f32 %v2017, %v2102
    %v2119 = vmax.f32 %v2018, %v2103
    %v2120 = vmax.f32 %v2019, %v2104
    %v2121 = vmax.f32 %v2020, %v2105
    %v2122 = vmax.f32 %v2021, %v2106
    %v2123 = vmax.f32 %v2022, %v2107
    %v2124 = vmax.f32 %v2023, %v2108
    %v2125 = vmax.f32 %v2024, %v2109
    %v2126 = vmax.f32 %v2025, %v2110
    %v2127 = vmax.f32 %v2026, %v2111
    %v2128 = vmax.f32 %v2027, %v2112
    %v2129 = vmax.f32 %v2028, %v2113
    %v2130 = vmax.f32 %v2029, %v2114
    %2131 = vst [vmem:[#allocation3] sm:$0xff] %v2115
    %2132 = vst [vmem:[#allocation3 + $0x8] sm:$0xff] %v2116
    %2133 = vst [vmem:[#allocation3 + $0x10] sm:$0xff] %v2117
    %2134 = vst [vmem:[#allocation3 + $0x18] sm:$0xff] %v2118
    %2135 = vst [vmem:[#allocation3 + $0x20] sm:$0xff] %v2119
    %2136 = vst [vmem:[#allocation3 + $0x28] sm:$0xff] %v2120
    %2137 = vst [vmem:[#allocation3 + $0x30] sm:$0xff] %v2121
    %2138 = vst [vmem:[#allocation3 + $0x38] sm:$0xff] %v2122
    %2139 = vst [vmem:[#allocation3 + $0x40] sm:$0xff] %v2123
    %2140 = vst [vmem:[#allocation3 + $0x48] sm:$0xff] %v2124
    %2141 = vst [vmem:[#allocation3 + $0x50] sm:$0xff] %v2125
    %2142 = vst [vmem:[#allocation3 + $0x58] sm:$0xff] %v2126
    %2143 = vst [vmem:[#allocation3 + $0x60] sm:$0xff] %v2127
    %2144 = vst [vmem:[#allocation3 + $0x68] sm:$0xff] %v2128
    %2145 = vst [vmem:[#allocation3 + $0x70] sm:$0xff] %v2129
    %2146 = vst [vmem:[#allocation3 + $0x78] sm:$0xff] %v2130
    // Predicated region
    $region22: #{tpu_custom_call.1} parent=1 // pred_check
      %p2147 = pneg %p45
    $region23: #{tpu_custom_call.1} parent=1 // pred_check_branch
      %2149 = sbr.rel (%p2147) target = $region25
    $region24: #{tpu_custom_call.1} parent=1 // pred_region
      %v2150 = vld [vmem:[#allocation2] sm:$0xff]
      %v2151 = vld [vmem:[#allocation2 + $0x8] sm:$0xff]
      %v2152 = vld [vmem:[#allocation2 + $0x10] sm:$0xff]
      %v2153 = vld [vmem:[#allocation2 + $0x18] sm:$0xff]
      %v2154 = vld [vmem:[#allocation2 + $0x20] sm:$0xff]
      %v2155 = vld [vmem:[#allocation2 + $0x28] sm:$0xff]
      %v2156 = vld [vmem:[#allocation2 + $0x30] sm:$0xff]
      %v2157 = vld [vmem:[#allocation2 + $0x38] sm:$0xff]
      %v2158 = vld [vmem:[#allocation2 + $0x40] sm:$0xff]
      %v2159 = vld [vmem:[#allocation2 + $0x48] sm:$0xff]
      %v2160 = vld [vmem:[#allocation2 + $0x50] sm:$0xff]
      %v2161 = vld [vmem:[#allocation2 + $0x58] sm:$0xff]
      %v2162 = vld [vmem:[#allocation2 + $0x60] sm:$0xff]
      %v2163 = vld [vmem:[#allocation2 + $0x68] sm:$0xff]
      %v2164 = vld [vmem:[#allocation2 + $0x70] sm:$0xff]
      %v2165 = vld [vmem:[#allocation2 + $0x78] sm:$0xff]
      %v2166 = vmul.f32 %v2150, 0.0625
      %v2167 = vmul.f32 %v2151, 0.0625
      %v2168 = vmul.f32 %v2152, 0.0625
      %v2169 = vmul.f32 %v2153, 0.0625
      %v2170 = vmul.f32 %v2154, 0.0625
      %v2171 = vmul.f32 %v2155, 0.0625
      %v2172 = vmul.f32 %v2156, 0.0625
      %v2173 = vmul.f32 %v2157, 0.0625
      %v2174 = vmul.f32 %v2158, 0.0625
      %v2175 = vmul.f32 %v2159, 0.0625
      %v2176 = vmul.f32 %v2160, 0.0625
      %v2177 = vmul.f32 %v2161, 0.0625
      %v2178 = vmul.f32 %v2162, 0.0625
      %v2179 = vmul.f32 %v2163, 0.0625
      %v2180 = vmul.f32 %v2164, 0.0625
      %v2181 = vmul.f32 %v2165, 0.0625
      %2182 = vst [vmem:[#allocation9] sm:$0xff] %v2166
      %2183 = vst [vmem:[#allocation9 + $0x10] sm:$0xff] %v2167
      %2184 = vst [vmem:[#allocation9 + $0x20] sm:$0xff] %v2168
      %2185 = vst [vmem:[#allocation9 + $0x30] sm:$0xff] %v2169
      %2186 = vst [vmem:[#allocation9 + $0x40] sm:$0xff] %v2170
      %2187 = vst [vmem:[#allocation9 + $0x50] sm:$0xff] %v2171
      %2188 = vst [vmem:[#allocation9 + $0x60] sm:$0xff] %v2172
      %2189 = vst [vmem:[#allocation9 + $0x70] sm:$0xff] %v2173
      %2190 = vst [vmem:[#allocation9 + $0x80] sm:$0xff] %v2174
      %2191 = vst [vmem:[#allocation9 + $0x90] sm:$0xff] %v2175
      %2192 = vst [vmem:[#allocation9 + $0xa0] sm:$0xff] %v2176
      %2193 = vst [vmem:[#allocation9 + $0xb0] sm:$0xff] %v2177
      %2194 = vst [vmem:[#allocation9 + $0xc0] sm:$0xff] %v2178
      %2195 = vst [vmem:[#allocation9 + $0xd0] sm:$0xff] %v2179
      %2196 = vst [vmem:[#allocation9 + $0xe0] sm:$0xff] %v2180
      %2197 = vst [vmem:[#allocation9 + $0xf0] sm:$0xff] %v2181
      %v2198 = vld [vmem:[#allocation3] sm:$0xff]
      %v2199 = vld [vmem:[#allocation3 + $0x8] sm:$0xff]
      %v2200 = vld [vmem:[#allocation3 + $0x10] sm:$0xff]
      %v2201 = vld [vmem:[#allocation3 + $0x18] sm:$0xff]
      %v2202 = vld [vmem:[#allocation3 + $0x20] sm:$0xff]
      %v2203 = vld [vmem:[#allocation3 + $0x28] sm:$0xff]
      %v2204 = vld [vmem:[#allocation3 + $0x30] sm:$0xff]
      %v2205 = vld [vmem:[#allocation3 + $0x38] sm:$0xff]
      %v2206 = vld [vmem:[#allocation3 + $0x40] sm:$0xff]
      %v2207 = vld [vmem:[#allocation3 + $0x48] sm:$0xff]
      %v2208 = vld [vmem:[#allocation3 + $0x50] sm:$0xff]
      %v2209 = vld [vmem:[#allocation3 + $0x58] sm:$0xff]
      %v2210 = vld [vmem:[#allocation3 + $0x60] sm:$0xff]
      %v2211 = vld [vmem:[#allocation3 + $0x68] sm:$0xff]
      %v2212 = vld [vmem:[#allocation3 + $0x70] sm:$0xff]
      %v2213 = vld [vmem:[#allocation3 + $0x78] sm:$0xff]
      %2214 = vst [vmem:[#allocation9 + $0x8] sm:$0xff] %v2198
      %2215 = vst [vmem:[#allocation9 + $0x18] sm:$0xff] %v2199
      %2216 = vst [vmem:[#allocation9 + $0x28] sm:$0xff] %v2200
      %2217 = vst [vmem:[#allocation9 + $0x38] sm:$0xff] %v2201
      %2218 = vst [vmem:[#allocation9 + $0x48] sm:$0xff] %v2202
      %2219 = vst [vmem:[#allocation9 + $0x58] sm:$0xff] %v2203
      %2220 = vst [vmem:[#allocation9 + $0x68] sm:$0xff] %v2204
      %2221 = vst [vmem:[#allocation9 + $0x78] sm:$0xff] %v2205
      %2222 = vst [vmem:[#allocation9 + $0x88] sm:$0xff] %v2206
      %2223 = vst [vmem:[#allocation9 + $0x98] sm:$0xff] %v2207
      %2224 = vst [vmem:[#allocation9 + $0xa8] sm:$0xff] %v2208
      %2225 = vst [vmem:[#allocation9 + $0xb8] sm:$0xff] %v2209
      %2226 = vst [vmem:[#allocation9 + $0xc8] sm:$0xff] %v2210
      %2227 = vst [vmem:[#allocation9 + $0xd8] sm:$0xff] %v2211
      %2228 = vst [vmem:[#allocation9 + $0xe8] sm:$0xff] %v2212
      %2229 = vst [vmem:[#allocation9 + $0xf8] sm:$0xff] %v2213
    $region25: #{tpu_custom_call.1} parent=1 // pred_fallthru
      _
    // Predicated region
    $region26: #{tpu_custom_call.1} parent=1 // pred_check
      _
    $region27: #{tpu_custom_call.1} parent=1 // pred_check_branch
      %2231 = sbr.rel (0) target = $region29
    $region28: #{tpu_custom_call.1} parent=1 // pred_region
      %2233 = vsyncadd [#allocation6], 0
      %s2234 = sshll.u32 [#allocation9], 4
      %s2235 = int_to_ptr.vmem [resolvable:$true] %s2234
      %s2236 = sshll.u32 %s2, 4
      %s2237 = int_to_ptr.hbm [resolvable:$true] %s2236
      %2242 = dma.vmem_to_hbm [thread:$0]  %s2235, 4096, %s2237, [#allocation6], 256, 256, 16
    $region29: #{tpu_custom_call.1} parent=1 // pred_fallthru
      _
    // Predicated region
    $region30: #{tpu_custom_call.1} parent=1 // pred_check
      _
    $region31: #{tpu_custom_call.1} parent=1 // pred_check_branch
      %2244 = sbr.rel (0) target = $region33
    $region32: #{tpu_custom_call.1} parent=1 // pred_region
      %2246 = dma.done [#allocation6], 4096
    $region33: #{tpu_custom_call.1} parent=1 // pred_fallthru
      _
    %2247 = vsyncpa [#allocation5], 1
    %2248 = vsyncpa [#allocation8], 1
    %2249 = vsyncpa [#allocation6], 1

</llo_original>
